<compile_context>
chip_gen: v7x
topology: tpu7x:2x2x1
jax: 0.10.0
libtpu: 0.0.40
codegen_flags: <defaults>
</compile_context>

<pallas_src>
import functools

import jax
import jax.numpy as jnp
from jax.experimental import pallas as pl
from jax.experimental.pallas import tpu as pltpu


# ----------------------------- Pallas kernel -------------------------------

def _fused_resnet_client_kernel(xpad_ref, winit_ref, scale_ref, bias_ref,
                                wblk_hbm, out_ref, slab_x, slab_y, wblk_vmem,
                                wblk_sem, *, n, h, w, c, n_block_convs):
    """init conv + (n_block_convs // 2) BasicBlocks, activations in VMEM.

    xpad_ref : (n*(h+2), w*cin)  row-padded NHWC input; row = b*(h+2)+i,
                                 col = j*cin + ci (no width-pad columns).
    winit_ref: (3, w*cin, w*c)   banded init-conv weight (one per ky tap).
    scale_ref/bias_ref: (1+n_block_convs, 1, w*c)  folded BN, tiled across w.
    wblk_hbm : (n_block_convs, 3, w*c, w*c)  banded block-conv weights (HBM).
    out_ref  : (n*h, w*c)        lane-dense output.
    slab_x/slab_y: (n*(h+2), w*c) VMEM activation slabs (zero pad rows only).
    """
    hp = h + 2
    wc = w * c
    m = n * hp - 2                       # rows of the whole-slab matmul result

    # Kick off the block-conv weight DMA; it overlaps with the init conv.
    wblk_cp = pltpu.make_async_copy(wblk_hbm, wblk_vmem, wblk_sem)
    wblk_cp.start()

    # Zero only the per-image top/bottom pad rows (interiors are fully
    # overwritten by every conv; xpad already carries its own zero pad rows).
    zrow = jnp.zeros((1, wc), jnp.float32)
    for b in range(n):
        for slab in (slab_x, slab_y):
            slab[b * hp:b * hp + 1, :] = zrow
            slab[b * hp + h + 1:b * hp + h + 2, :] = zrow

    def conv_bn_act(src, wget, scale, bias, dst, residual=None, to_out=False):
        # 3 whole-slab MXU matmuls (one per ky tap), accumulated in f32.
        acc = jnp.dot(src[0:m, :], wget(0), preferred_element_type=jnp.float32)
        for ky in (1, 2):
            acc = acc + jnp.dot(src[ky:ky + m, :], wget(ky),
                                preferred_element_type=jnp.float32)
        y = acc * scale + bias                         # folded BatchNorm
        if residual is not None:                       # BasicBlock identity
            # Residual is read in full BEFORE any store below (dst may alias).
            y = y + residual[1:1 + m, :]
        y = jnp.maximum(y, 0.0)                        # ReLU
        # Store only the valid interior rows of each image; result rows at
        # image boundaries mix adjacent images and are discarded.
        for b in range(n):
            rows = y[b * hp:b * hp + h, :]
            if to_out:
                out_ref[b * h:(b + 1) * h, :] = rows
            else:
                dst[b * hp + 1:b * hp + 1 + h, :] = rows

    # init: Conv3x3(no bias) + BN + ReLU  -> slab_x (overlaps wblk DMA)
    conv_bn_act(xpad_ref, lambda ky: winit_ref[ky].astype(jnp.float32),
                scale_ref[0], bias_ref[0], dst=slab_x)

    # Block-conv weights must be resident before the first block conv.
    wblk_cp.wait()

    # BasicBlocks: [conv+BN+ReLU, conv+BN] + identity residual + ReLU
    for blk in range(n_block_convs // 2):
        k1 = 2 * blk
        k2 = 2 * blk + 1
        is_last = blk == (n_block_convs // 2 - 1)
        conv_bn_act(slab_x,
                    lambda ky, k=k1: wblk_vmem[k, ky].astype(jnp.float32),
                    scale_ref[k1 + 1], bias_ref[k1 + 1], dst=slab_y)
        conv_bn_act(slab_y,
                    lambda ky, k=k2: wblk_vmem[k, ky].astype(jnp.float32),
                    scale_ref[k2 + 1], bias_ref[k2 + 1], dst=slab_x,
                    residual=slab_x, to_out=is_last)


# --------------------------- parameter packing ------------------------------

def pack_client_params(params, width, weight_dtype=jnp.float32):
    """Fold BN and build the (width-cropped) banded conv weights.

    Banded weight per ky tap: G_ky[j*Cin + ci, x*Cout + o] = W[o, ci, ky, kx]
    with kx = j - x + 1 (0 <= kx <= 2) and j, x in 0..width-1 (no pad cols).
    Done once outside the hot path; weight_dtype=bfloat16 halves the weight
    DMA (accumulation in the kernel stays f32).
    """
    def band(w_oihw):
        cout, ci = w_oihw.shape[0], w_oihw.shape[1]
        mats = []
        for ky in range(3):
            g = jnp.zeros((width * ci, width * cout), jnp.float32)
            for kx in range(3):
                shift = jnp.eye(width, width, k=1 - kx, dtype=jnp.float32)
                g = g + jnp.kron(shift,
                                 w_oihw[:, :, ky, kx].T.astype(jnp.float32))
            mats.append(g)
        return jnp.stack(mats).astype(weight_dtype)

    winit = band(params["init"]["w"])
    blk_ws = []
    scales = [params["init"]["scale"]]
    biases = [params["init"]["bias"]]
    for blk in params["blocks"]:
        blk_ws.append(band(blk["w1"]))
        blk_ws.append(band(blk["w2"]))
        scales += [blk["scale1"], blk["scale2"]]
        biases += [blk["bias1"], blk["bias2"]]
    if not blk_ws:
        raise ValueError("fused ResNetClient kernel requires arc_config >= 1")
    wblk = jnp.stack(blk_ws)
    scales = jnp.stack([jnp.tile(s.astype(jnp.float32), width)
                        for s in scales])[:, None, :]
    biases = jnp.stack([jnp.tile(b.astype(jnp.float32), width)
                        for b in biases])[:, None, :]
    return {"winit": winit, "wblk": wblk, "scale": scales, "bias": biases}


# ------------------------------ forward pass --------------------------------

@jax.jit
def resnet_client_forward(packed, x_nchw):
    """Matches ResNetClient.forward: blocks(init(x)).  NCHW in / NCHW out."""
    n, cin, h, w = x_nchw.shape
    wblk = packed["wblk"]
    n_block_convs = wblk.shape[0]
    kblk = wblk.shape[2]                 # == w * c
    c = wblk.shape[3] // w
    wc = w * c

    # NCHW -> row-padded 2-D NHWC slab: row = b*(h+2)+i, col = j*cin + ci.
    x = jnp.transpose(x_nchw, (0, 2, 3, 1)).astype(jnp.float32)
    xp = jnp.pad(x, ((0, 0), (1, 1), (0, 0), (0, 0)))     # pad H only
    xp = xp.reshape(n * (h + 2), w * cin)

    m_rows = n * (h + 2) - 2
    flops = 2 * m_rows * wc * 3 * (w * cin + n_block_convs * kblk)

    def _nbytes(a):
        return a.size * a.dtype.itemsize

    bytes_accessed = (_nbytes(xp) + _nbytes(packed["winit"]) + _nbytes(wblk)
                      + _nbytes(packed["scale"]) + _nbytes(packed["bias"])
                      + n * h * wc * 4)

    kernel = functools.partial(_fused_resnet_client_kernel,
                               n=n, h=h, w=w, c=c,
                               n_block_convs=n_block_convs)
    out2 = pl.pallas_call(
        kernel,
        out_shape=jax.ShapeDtypeStruct((n * h, wc), jnp.float32),
        in_specs=[pl.BlockSpec(memory_space=pltpu.MemorySpace.VMEM)] * 4
                 + [pl.BlockSpec(memory_space=pl.ANY)],     # wblk stays in HBM
        out_specs=pl.BlockSpec(memory_space=pltpu.MemorySpace.VMEM),
        scratch_shapes=[pltpu.VMEM((n * (h + 2), wc), jnp.float32),   # slab_x
                        pltpu.VMEM((n * (h + 2), wc), jnp.float32),   # slab_y
                        pltpu.VMEM(wblk.shape, wblk.dtype),           # wblk_vmem
                        pltpu.SemaphoreType.DMA],
        cost_estimate=pl.CostEstimate(flops=flops, transcendentals=0,
                                      bytes_accessed=bytes_accessed),
    )(xp, packed["winit"], packed["scale"], packed["bias"], wblk)

    return jnp.transpose(out2.reshape(n, h, w, c), (0, 3, 1, 2))


# ------------------------- parameters (deterministic) ----------------------

def _fold_bn(gamma, beta, mean, var, eps=1e-5):
    scale = gamma / jnp.sqrt(var + eps)
    bias = beta - mean * scale
    return scale, bias


def _rand_bn(key, c):
    k1, k2, k3, k4 = jax.random.split(key, 4)
    gamma = 0.5 + jax.random.uniform(k1, (c,), jnp.float32)
    beta = 0.1 * jax.random.normal(k2, (c,), jnp.float32)
    mean = 0.1 * jax.random.normal(k3, (c,), jnp.float32)
    var = 0.5 + jax.random.uniform(k4, (c,), jnp.float32)
    return _fold_bn(gamma, beta, mean, var)


def init_resnet_client_params(key, cin=3, c=8, arc_config=2):
    keys = jax.random.split(key, 2 + 4 * arc_config)
    params = {}
    w0 = 0.1 * jax.random.normal(keys[0], (c, cin, 3, 3), jnp.float32)
    s0, b0 = _rand_bn(keys[1], c)
    params["init"] = {"w": w0, "scale": s0, "bias": b0}
    blocks = []
    for bidx in range(arc_config):
        kw1, kb1, kw2, kb2 = keys[2 + 4 * bidx: 6 + 4 * bidx]
        w1 = 0.1 * jax.random.normal(kw1, (c, c, 3, 3), jnp.float32)
        s1, b1 = _rand_bn(kb1, c)
        w2 = 0.1 * jax.random.normal(kw2, (c, c, 3, 3), jnp.float32)
        s2, b2 = _rand_bn(kb2, c)
        blocks.append({"w1": w1, "scale1": s1, "bias1": b1,
                       "w2": w2, "scale2": s2, "bias2": b2})
    params["blocks"] = blocks
    return params


# ------------------------------ pure-JAX ref --------------------------------

def _ref_conv_bn_act(x_nhwc, w_oihw, scale, bias, residual=None, relu=True):
    y = jax.lax.conv_general_dilated(
        x_nhwc, jnp.transpose(w_oihw, (2, 3, 1, 0)),
        window_strides=(1, 1), padding="SAME",
        dimension_numbers=("NHWC", "HWIO", "NHWC"))
    y = y * scale + bias
    if residual is not None:
        y = y + residual
    if relu:
        y = jnp.maximum(y, 0.0)
    return y


def _ref_forward(params, x_nchw):
    x = jnp.transpose(x_nchw, (0, 2, 3, 1))
    p = params["init"]
    x = _ref_conv_bn_act(x, p["w"], p["scale"], p["bias"], relu=True)
    for blk in params["blocks"]:
        y = _ref_conv_bn_act(x, blk["w1"], blk["scale1"], blk["bias1"], relu=True)
        x = _ref_conv_bn_act(y, blk["w2"], blk["scale2"], blk["bias2"],
                             residual=x, relu=True)
    return jnp.transpose(x, (0, 3, 1, 2))


def _round_weights_bf16(params):
    r = lambda w: w.astype(jnp.bfloat16).astype(jnp.float32)
    out = {"init": dict(params["init"], w=r(params["init"]["w"])), "blocks": []}
    for blk in params["blocks"]:
        out["blocks"].append(dict(blk, w1=r(blk["w1"]), w2=r(blk["w2"])))
    return out


# ----------------------------------- main -----------------------------------

if __name__ == "__main__":
    key = jax.random.PRNGKey(0)
    kx, kp = jax.random.split(key)
    # PyTorch-convention NCHW input: batch=2, channels=3, spatial=16x16
    x = jax.random.normal(kx, (2, 3, 16, 16), jnp.float32)
    params = init_resnet_client_params(kp, cin=3, c=8, arc_config=2)

    # f32-packed weights: exact match with the f32 JAX reference.
    packed = pack_client_params(params, width=16)
    out = jax.block_until_ready(resnet_client_forward(packed, x))
    ref = _ref_forward(params, x)
    assert out.shape == (2, 8, 16, 16), out.shape
    assert jnp.allclose(out, ref, atol=1e-4, rtol=1e-4), "f32 mismatch vs ref"

    # bf16-packed weights (halves the dominant weight DMA on v5e/v6e);
    # validated against the reference run with bf16-rounded weights, since the
    # kernel still accumulates in f32 after the in-kernel up-cast.
    packed_bf16 = pack_client_params(params, width=16,
                                     weight_dtype=jnp.bfloat16)
    out_bf16 = jax.block_until_ready(resnet_client_forward(packed_bf16, x))
    ref_bf16 = _ref_forward(_round_weights_bf16(params), x)
    assert jnp.allclose(out_bf16, ref_bf16, atol=1e-4, rtol=1e-4), \
        "bf16-weight mismatch vs bf16-rounded reference"

    print("KERNEL_OK")
</pallas_src>

<mosaic_0001>
module attributes {stable_mosaic.version = 11 : i64} {
  func.func @_fused_resnet_client_kernel(%arg0: memref<36x48xf32, #tpu.memory_space<vmem>>, %arg1: memref<3x48x128xf32, #tpu.memory_space<vmem>>, %arg2: memref<5x1x128xf32, #tpu.memory_space<vmem>>, %arg3: memref<5x1x128xf32, #tpu.memory_space<vmem>>, %arg4: memref<4x3x128x128xf32, #tpu.memory_space<any>>, %arg5: memref<32x128xf32, #tpu.memory_space<vmem>>, %arg6: memref<36x128xf32, #tpu.memory_space<vmem>>, %arg7: memref<36x128xf32, #tpu.memory_space<vmem>>, %arg8: memref<4x3x128x128xf32, #tpu.memory_space<vmem>>, %arg9: memref<!tpu.dma_semaphore, #tpu.memory_space<semaphore_mem>>) attributes {dimension_semantics = [], scalar_prefetch = 0 : i64, scratch_operands = 4 : i64, tpu.core_type = #tpu.core_type<tc>} {
    tpu.enqueue_dma source(%arg4 : memref<4x3x128x128xf32, #tpu.memory_space<any>>) target(%arg8 : memref<4x3x128x128xf32, #tpu.memory_space<vmem>>) target_semaphore(%arg9 : memref<!tpu.dma_semaphore, #tpu.memory_space<semaphore_mem>>)
    %cst = arith.constant 0.000000e+00 : f32
    %0 = vector.broadcast %cst : f32 to vector<1x128xf32>
    %c0 = arith.constant 0 : index
    %c0_0 = arith.constant 0 : index
    %1 = vector.load %arg6[%c0, %c0_0] : memref<36x128xf32, #tpu.memory_space<vmem>>, vector<1x128xf32>
    tpu.vector_store %arg6[%c0, %c0_0], %0 {strides = array<i32>} : memref<36x128xf32, #tpu.memory_space<vmem>>, vector<1x128xf32>,
    %c17 = arith.constant 17 : index
    %c0_1 = arith.constant 0 : index
    %2 = vector.load %arg6[%c17, %c0_1] : memref<36x128xf32, #tpu.memory_space<vmem>>, vector<1x128xf32>
    tpu.vector_store %arg6[%c17, %c0_1], %0 {strides = array<i32>} : memref<36x128xf32, #tpu.memory_space<vmem>>, vector<1x128xf32>,
    %c0_2 = arith.constant 0 : index
    %c0_3 = arith.constant 0 : index
    %3 = vector.load %arg7[%c0_2, %c0_3] : memref<36x128xf32, #tpu.memory_space<vmem>>, vector<1x128xf32>
    tpu.vector_store %arg7[%c0_2, %c0_3], %0 {strides = array<i32>} : memref<36x128xf32, #tpu.memory_space<vmem>>, vector<1x128xf32>,
    %c17_4 = arith.constant 17 : index
    %c0_5 = arith.constant 0 : index
    %4 = vector.load %arg7[%c17_4, %c0_5] : memref<36x128xf32, #tpu.memory_space<vmem>>, vector<1x128xf32>
    tpu.vector_store %arg7[%c17_4, %c0_5], %0 {strides = array<i32>} : memref<36x128xf32, #tpu.memory_space<vmem>>, vector<1x128xf32>,
    %c18 = arith.constant 18 : index
    %c0_6 = arith.constant 0 : index
    %5 = vector.load %arg6[%c18, %c0_6] : memref<36x128xf32, #tpu.memory_space<vmem>>, vector<1x128xf32>
    tpu.vector_store %arg6[%c18, %c0_6], %0 {strides = array<i32>} : memref<36x128xf32, #tpu.memory_space<vmem>>, vector<1x128xf32>,
    %c35 = arith.constant 35 : index
    %c0_7 = arith.constant 0 : index
    %6 = vector.load %arg6[%c35, %c0_7] : memref<36x128xf32, #tpu.memory_space<vmem>>, vector<1x128xf32>
    tpu.vector_store %arg6[%c35, %c0_7], %0 {strides = array<i32>} : memref<36x128xf32, #tpu.memory_space<vmem>>, vector<1x128xf32>,
    %c18_8 = arith.constant 18 : index
    %c0_9 = arith.constant 0 : index
    %7 = vector.load %arg7[%c18_8, %c0_9] : memref<36x128xf32, #tpu.memory_space<vmem>>, vector<1x128xf32>
    tpu.vector_store %arg7[%c18_8, %c0_9], %0 {strides = array<i32>} : memref<36x128xf32, #tpu.memory_space<vmem>>, vector<1x128xf32>,
    %c35_10 = arith.constant 35 : index
    %c0_11 = arith.constant 0 : index
    %8 = vector.load %arg7[%c35_10, %c0_11] : memref<36x128xf32, #tpu.memory_space<vmem>>, vector<1x128xf32>
    tpu.vector_store %arg7[%c35_10, %c0_11], %0 {strides = array<i32>} : memref<36x128xf32, #tpu.memory_space<vmem>>, vector<1x128xf32>,
    %c0_12 = arith.constant 0 : index
    %c0_13 = arith.constant 0 : index
    %c0_14 = arith.constant 0 : index
    %9 = vector.load %arg2[%c0_12, %c0_13, %c0_14] : memref<5x1x128xf32, #tpu.memory_space<vmem>>, vector<1x1x128xf32>
    %10 = vector.shape_cast %9 : vector<1x1x128xf32> to vector<1x128xf32>
    %c0_15 = arith.constant 0 : index
    %c0_16 = arith.constant 0 : index
    %c0_17 = arith.constant 0 : index
    %11 = vector.load %arg3[%c0_15, %c0_16, %c0_17] : memref<5x1x128xf32, #tpu.memory_space<vmem>>, vector<1x1x128xf32>
    %12 = vector.shape_cast %11 : vector<1x1x128xf32> to vector<1x128xf32>
    %c0_18 = arith.constant 0 : index
    %c0_19 = arith.constant 0 : index
    %13 = vector.load %arg0[%c0_18, %c0_19] : memref<36x48xf32, #tpu.memory_space<vmem>>, vector<34x48xf32>
    %c0_20 = arith.constant 0 : index
    %c0_21 = arith.constant 0 : index
    %c0_22 = arith.constant 0 : index
    %14 = vector.load %arg1[%c0_20, %c0_21, %c0_22] : memref<3x48x128xf32, #tpu.memory_space<vmem>>, vector<1x48x128xf32>
    %15 = vector.shape_cast %14 : vector<1x48x128xf32> to vector<48x128xf32>
    %cst_23 = arith.constant dense<0.000000e+00> : vector<34x128xf32>
    %16 = tpu.matmul %13, %15, %cst_23 {dimension_numbers = #tpu.dot_dimension_numbers<[1], [0], [0], [1], [0, 0, 1, 1], [], []>} : vector<34x48xf32>, vector<48x128xf32>, vector<34x128xf32> -> vector<34x128xf32>
    %c1 = arith.constant 1 : index
    %c0_24 = arith.constant 0 : index
    %17 = vector.load %arg0[%c1, %c0_24] : memref<36x48xf32, #tpu.memory_space<vmem>>, vector<34x48xf32>
    %c1_25 = arith.constant 1 : index
    %c0_26 = arith.constant 0 : index
    %c0_27 = arith.constant 0 : index
    %18 = vector.load %arg1[%c1_25, %c0_26, %c0_27] : memref<3x48x128xf32, #tpu.memory_space<vmem>>, vector<1x48x128xf32>
    %19 = vector.shape_cast %18 : vector<1x48x128xf32> to vector<48x128xf32>
    %cst_28 = arith.constant dense<0.000000e+00> : vector<34x128xf32>
    %20 = tpu.matmul %17, %19, %cst_28 {dimension_numbers = #tpu.dot_dimension_numbers<[1], [0], [0], [1], [0, 0, 1, 1], [], []>} : vector<34x48xf32>, vector<48x128xf32>, vector<34x128xf32> -> vector<34x128xf32>
    %21 = arith.addf %16, %20 : vector<34x128xf32>
    %c2 = arith.constant 2 : index
    %c0_29 = arith.constant 0 : index
    %22 = vector.load %arg0[%c2, %c0_29] : memref<36x48xf32, #tpu.memory_space<vmem>>, vector<34x48xf32>
    %c2_30 = arith.constant 2 : index
    %c0_31 = arith.constant 0 : index
    %c0_32 = arith.constant 0 : index
    %23 = vector.load %arg1[%c2_30, %c0_31, %c0_32] : memref<3x48x128xf32, #tpu.memory_space<vmem>>, vector<1x48x128xf32>
    %24 = vector.shape_cast %23 : vector<1x48x128xf32> to vector<48x128xf32>
    %cst_33 = arith.constant dense<0.000000e+00> : vector<34x128xf32>
    %25 = tpu.matmul %22, %24, %cst_33 {dimension_numbers = #tpu.dot_dimension_numbers<[1], [0], [0], [1], [0, 0, 1, 1], [], []>} : vector<34x48xf32>, vector<48x128xf32>, vector<34x128xf32> -> vector<34x128xf32>
    %26 = arith.addf %21, %25 : vector<34x128xf32>
    %27 = vector.broadcast %10 : vector<1x128xf32> to vector<34x128xf32>
    %28 = arith.mulf %26, %27 : vector<34x128xf32>
    %29 = vector.broadcast %12 : vector<1x128xf32> to vector<34x128xf32>
    %30 = arith.addf %28, %29 : vector<34x128xf32>
    %cst_34 = arith.constant 0.000000e+00 : f32
    %31 = vector.broadcast %cst_34 : f32 to vector<34x128xf32>
    %32 = arith.maximumf %30, %31 : vector<34x128xf32>
    %33 = vector.extract_strided_slice %32 {offsets = [0, 0], sizes = [16, 128], strides = [1, 1]} : vector<34x128xf32> to vector<16x128xf32>
    %c1_35 = arith.constant 1 : index
    %c0_36 = arith.constant 0 : index
    %34 = vector.load %arg6[%c1_35, %c0_36] : memref<36x128xf32, #tpu.memory_space<vmem>>, vector<16x128xf32>
    tpu.vector_store %arg6[%c1_35, %c0_36], %33 {strides = array<i32>} : memref<36x128xf32, #tpu.memory_space<vmem>>, vector<16x128xf32>,
    %35 = vector.extract_strided_slice %32 {offsets = [18, 0], sizes = [16, 128], strides = [1, 1]} : vector<34x128xf32> to vector<16x128xf32>
    %c19 = arith.constant 19 : index
    %c0_37 = arith.constant 0 : index
    %36 = vector.load %arg6[%c19, %c0_37] : memref<36x128xf32, #tpu.memory_space<vmem>>, vector<16x128xf32>
    tpu.vector_store %arg6[%c19, %c0_37], %35 {strides = array<i32>} : memref<36x128xf32, #tpu.memory_space<vmem>>, vector<16x128xf32>,
    tpu.wait_dma2 semaphore(%arg9 : memref<!tpu.dma_semaphore, #tpu.memory_space<semaphore_mem>>) src(%arg4 : memref<4x3x128x128xf32, #tpu.memory_space<any>>) dst(%arg8 : memref<4x3x128x128xf32, #tpu.memory_space<vmem>>)
    %c1_38 = arith.constant 1 : index
    %c0_39 = arith.constant 0 : index
    %c0_40 = arith.constant 0 : index
    %37 = vector.load %arg2[%c1_38, %c0_39, %c0_40] : memref<5x1x128xf32, #tpu.memory_space<vmem>>, vector<1x1x128xf32>
    %38 = vector.shape_cast %37 : vector<1x1x128xf32> to vector<1x128xf32>
    %c1_41 = arith.constant 1 : index
    %c0_42 = arith.constant 0 : index
    %c0_43 = arith.constant 0 : index
    %39 = vector.load %arg3[%c1_41, %c0_42, %c0_43] : memref<5x1x128xf32, #tpu.memory_space<vmem>>, vector<1x1x128xf32>
    %40 = vector.shape_cast %39 : vector<1x1x128xf32> to vector<1x128xf32>
    %c0_44 = arith.constant 0 : index
    %c0_45 = arith.constant 0 : index
    %41 = vector.load %arg6[%c0_44, %c0_45] : memref<36x128xf32, #tpu.memory_space<vmem>>, vector<34x128xf32>
    %c0_46 = arith.constant 0 : index
    %c0_47 = arith.constant 0 : index
    %c0_48 = arith.constant 0 : index
    %c0_49 = arith.constant 0 : index
    %42 = vector.load %arg8[%c0_46, %c0_47, %c0_48, %c0_49] : memref<4x3x128x128xf32, #tpu.memory_space<vmem>>, vector<1x1x128x128xf32>
    %43 = vector.shape_cast %42 : vector<1x1x128x128xf32> to vector<128x128xf32>
    %cst_50 = arith.constant dense<0.000000e+00> : vector<34x128xf32>
    %44 = tpu.matmul %41, %43, %cst_50 {dimension_numbers = #tpu.dot_dimension_numbers<[1], [0], [0], [1], [0, 0, 1, 1], [], []>} : vector<34x128xf32>, vector<128x128xf32>, vector<34x128xf32> -> vector<34x128xf32>
    %c1_51 = arith.constant 1 : index
    %c0_52 = arith.constant 0 : index
    %45 = vector.load %arg6[%c1_51, %c0_52] : memref<36x128xf32, #tpu.memory_space<vmem>>, vector<34x128xf32>
    %c0_53 = arith.constant 0 : index
    %c1_54 = arith.constant 1 : index
    %c0_55 = arith.constant 0 : index
    %c0_56 = arith.constant 0 : index
    %46 = vector.load %arg8[%c0_53, %c1_54, %c0_55, %c0_56] : memref<4x3x128x128xf32, #tpu.memory_space<vmem>>, vector<1x1x128x128xf32>
    %47 = vector.shape_cast %46 : vector<1x1x128x128xf32> to vector<128x128xf32>
    %cst_57 = arith.constant dense<0.000000e+00> : vector<34x128xf32>
    %48 = tpu.matmul %45, %47, %cst_57 {dimension_numbers = #tpu.dot_dimension_numbers<[1], [0], [0], [1], [0, 0, 1, 1], [], []>} : vector<34x128xf32>, vector<128x128xf32>, vector<34x128xf32> -> vector<34x128xf32>
    %49 = arith.addf %44, %48 : vector<34x128xf32>
    %c2_58 = arith.constant 2 : index
    %c0_59 = arith.constant 0 : index
    %50 = vector.load %arg6[%c2_58, %c0_59] : memref<36x128xf32, #tpu.memory_space<vmem>>, vector<34x128xf32>
    %c0_60 = arith.constant 0 : index
    %c2_61 = arith.constant 2 : index
    %c0_62 = arith.constant 0 : index
    %c0_63 = arith.constant 0 : index
    %51 = vector.load %arg8[%c0_60, %c2_61, %c0_62, %c0_63] : memref<4x3x128x128xf32, #tpu.memory_space<vmem>>, vector<1x1x128x128xf32>
    %52 = vector.shape_cast %51 : vector<1x1x128x128xf32> to vector<128x128xf32>
    %cst_64 = arith.constant dense<0.000000e+00> : vector<34x128xf32>
    %53 = tpu.matmul %50, %52, %cst_64 {dimension_numbers = #tpu.dot_dimension_numbers<[1], [0], [0], [1], [0, 0, 1, 1], [], []>} : vector<34x128xf32>, vector<128x128xf32>, vector<34x128xf32> -> vector<34x128xf32>
    %54 = arith.addf %49, %53 : vector<34x128xf32>
    %55 = vector.broadcast %38 : vector<1x128xf32> to vector<34x128xf32>
    %56 = arith.mulf %54, %55 : vector<34x128xf32>
    %57 = vector.broadcast %40 : vector<1x128xf32> to vector<34x128xf32>
    %58 = arith.addf %56, %57 : vector<34x128xf32>
    %cst_65 = arith.constant 0.000000e+00 : f32
    %59 = vector.broadcast %cst_65 : f32 to vector<34x128xf32>
    %60 = arith.maximumf %58, %59 : vector<34x128xf32>
    %61 = vector.extract_strided_slice %60 {offsets = [0, 0], sizes = [16, 128], strides = [1, 1]} : vector<34x128xf32> to vector<16x128xf32>
    %c1_66 = arith.constant 1 : index
    %c0_67 = arith.constant 0 : index
    %62 = vector.load %arg7[%c1_66, %c0_67] : memref<36x128xf32, #tpu.memory_space<vmem>>, vector<16x128xf32>
    tpu.vector_store %arg7[%c1_66, %c0_67], %61 {strides = array<i32>} : memref<36x128xf32, #tpu.memory_space<vmem>>, vector<16x128xf32>,
    %63 = vector.extract_strided_slice %60 {offsets = [18, 0], sizes = [16, 128], strides = [1, 1]} : vector<34x128xf32> to vector<16x128xf32>
    %c19_68 = arith.constant 19 : index
    %c0_69 = arith.constant 0 : index
    %64 = vector.load %arg7[%c19_68, %c0_69] : memref<36x128xf32, #tpu.memory_space<vmem>>, vector<16x128xf32>
    tpu.vector_store %arg7[%c19_68, %c0_69], %63 {strides = array<i32>} : memref<36x128xf32, #tpu.memory_space<vmem>>, vector<16x128xf32>,
    %c2_70 = arith.constant 2 : index
    %c0_71 = arith.constant 0 : index
    %c0_72 = arith.constant 0 : index
    %65 = vector.load %arg2[%c2_70, %c0_71, %c0_72] : memref<5x1x128xf32, #tpu.memory_space<vmem>>, vector<1x1x128xf32>
    %66 = vector.shape_cast %65 : vector<1x1x128xf32> to vector<1x128xf32>
    %c2_73 = arith.constant 2 : index
    %c0_74 = arith.constant 0 : index
    %c0_75 = arith.constant 0 : index
    %67 = vector.load %arg3[%c2_73, %c0_74, %c0_75] : memref<5x1x128xf32, #tpu.memory_space<vmem>>, vector<1x1x128xf32>
    %68 = vector.shape_cast %67 : vector<1x1x128xf32> to vector<1x128xf32>
    %c0_76 = arith.constant 0 : index
    %c0_77 = arith.constant 0 : index
    %69 = vector.load %arg7[%c0_76, %c0_77] : memref<36x128xf32, #tpu.memory_space<vmem>>, vector<34x128xf32>
    %c1_78 = arith.constant 1 : index
    %c0_79 = arith.constant 0 : index
    %c0_80 = arith.constant 0 : index
    %c0_81 = arith.constant 0 : index
    %70 = vector.load %arg8[%c1_78, %c0_79, %c0_80, %c0_81] : memref<4x3x128x128xf32, #tpu.memory_space<vmem>>, vector<1x1x128x128xf32>
    %71 = vector.shape_cast %70 : vector<1x1x128x128xf32> to vector<128x128xf32>
    %cst_82 = arith.constant dense<0.000000e+00> : vector<34x128xf32>
    %72 = tpu.matmul %69, %71, %cst_82 {dimension_numbers = #tpu.dot_dimension_numbers<[1], [0], [0], [1], [0, 0, 1, 1], [], []>} : vector<34x128xf32>, vector<128x128xf32>, vector<34x128xf32> -> vector<34x128xf32>
    %c1_83 = arith.constant 1 : index
    %c0_84 = arith.constant 0 : index
    %73 = vector.load %arg7[%c1_83, %c0_84] : memref<36x128xf32, #tpu.memory_space<vmem>>, vector<34x128xf32>
    %c1_85 = arith.constant 1 : index
    %c1_86 = arith.constant 1 : index
    %c0_87 = arith.constant 0 : index
    %c0_88 = arith.constant 0 : index
    %74 = vector.load %arg8[%c1_85, %c1_86, %c0_87, %c0_88] : memref<4x3x128x128xf32, #tpu.memory_space<vmem>>, vector<1x1x128x128xf32>
    %75 = vector.shape_cast %74 : vector<1x1x128x128xf32> to vector<128x128xf32>
    %cst_89 = arith.constant dense<0.000000e+00> : vector<34x128xf32>
    %76 = tpu.matmul %73, %75, %cst_89 {dimension_numbers = #tpu.dot_dimension_numbers<[1], [0], [0], [1], [0, 0, 1, 1], [], []>} : vector<34x128xf32>, vector<128x128xf32>, vector<34x128xf32> -> vector<34x128xf32>
    %77 = arith.addf %72, %76 : vector<34x128xf32>
    %c2_90 = arith.constant 2 : index
    %c0_91 = arith.constant 0 : index
    %78 = vector.load %arg7[%c2_90, %c0_91] : memref<36x128xf32, #tpu.memory_space<vmem>>, vector<34x128xf32>
    %c1_92 = arith.constant 1 : index
    %c2_93 = arith.constant 2 : index
    %c0_94 = arith.constant 0 : index
    %c0_95 = arith.constant 0 : index
    %79 = vector.load %arg8[%c1_92, %c2_93, %c0_94, %c0_95] : memref<4x3x128x128xf32, #tpu.memory_space<vmem>>, vector<1x1x128x128xf32>
    %80 = vector.shape_cast %79 : vector<1x1x128x128xf32> to vector<128x128xf32>
    %cst_96 = arith.constant dense<0.000000e+00> : vector<34x128xf32>
    %81 = tpu.matmul %78, %80, %cst_96 {dimension_numbers = #tpu.dot_dimension_numbers<[1], [0], [0], [1], [0, 0, 1, 1], [], []>} : vector<34x128xf32>, vector<128x128xf32>, vector<34x128xf32> -> vector<34x128xf32>
    %82 = arith.addf %77, %81 : vector<34x128xf32>
    %83 = vector.broadcast %66 : vector<1x128xf32> to vector<34x128xf32>
    %84 = arith.mulf %82, %83 : vector<34x128xf32>
    %85 = vector.broadcast %68 : vector<1x128xf32> to vector<34x128xf32>
    %86 = arith.addf %84, %85 : vector<34x128xf32>
    %c1_97 = arith.constant 1 : index
    %c0_98 = arith.constant 0 : index
    %87 = vector.load %arg6[%c1_97, %c0_98] : memref<36x128xf32, #tpu.memory_space<vmem>>, vector<34x128xf32>
    %88 = arith.addf %86, %87 : vector<34x128xf32>
    %cst_99 = arith.constant 0.000000e+00 : f32
    %89 = vector.broadcast %cst_99 : f32 to vector<34x128xf32>
    %90 = arith.maximumf %88, %89 : vector<34x128xf32>
    %91 = vector.extract_strided_slice %90 {offsets = [0, 0], sizes = [16, 128], strides = [1, 1]} : vector<34x128xf32> to vector<16x128xf32>
    %c1_100 = arith.constant 1 : index
    %c0_101 = arith.constant 0 : index
    %92 = vector.load %arg6[%c1_100, %c0_101] : memref<36x128xf32, #tpu.memory_space<vmem>>, vector<16x128xf32>
    tpu.vector_store %arg6[%c1_100, %c0_101], %91 {strides = array<i32>} : memref<36x128xf32, #tpu.memory_space<vmem>>, vector<16x128xf32>,
    %93 = vector.extract_strided_slice %90 {offsets = [18, 0], sizes = [16, 128], strides = [1, 1]} : vector<34x128xf32> to vector<16x128xf32>
    %c19_102 = arith.constant 19 : index
    %c0_103 = arith.constant 0 : index
    %94 = vector.load %arg6[%c19_102, %c0_103] : memref<36x128xf32, #tpu.memory_space<vmem>>, vector<16x128xf32>
    tpu.vector_store %arg6[%c19_102, %c0_103], %93 {strides = array<i32>} : memref<36x128xf32, #tpu.memory_space<vmem>>, vector<16x128xf32>,
    %c3 = arith.constant 3 : index
    %c0_104 = arith.constant 0 : index
    %c0_105 = arith.constant 0 : index
    %95 = vector.load %arg2[%c3, %c0_104, %c0_105] : memref<5x1x128xf32, #tpu.memory_space<vmem>>, vector<1x1x128xf32>
    %96 = vector.shape_cast %95 : vector<1x1x128xf32> to vector<1x128xf32>
    %c3_106 = arith.constant 3 : index
    %c0_107 = arith.constant 0 : index
    %c0_108 = arith.constant 0 : index
    %97 = vector.load %arg3[%c3_106, %c0_107, %c0_108] : memref<5x1x128xf32, #tpu.memory_space<vmem>>, vector<1x1x128xf32>
    %98 = vector.shape_cast %97 : vector<1x1x128xf32> to vector<1x128xf32>
    %c0_109 = arith.constant 0 : index
    %c0_110 = arith.constant 0 : index
    %99 = vector.load %arg6[%c0_109, %c0_110] : memref<36x128xf32, #tpu.memory_space<vmem>>, vector<34x128xf32>
    %c2_111 = arith.constant 2 : index
    %c0_112 = arith.constant 0 : index
    %c0_113 = arith.constant 0 : index
    %c0_114 = arith.constant 0 : index
    %100 = vector.load %arg8[%c2_111, %c0_112, %c0_113, %c0_114] : memref<4x3x128x128xf32, #tpu.memory_space<vmem>>, vector<1x1x128x128xf32>
    %101 = vector.shape_cast %100 : vector<1x1x128x128xf32> to vector<128x128xf32>
    %cst_115 = arith.constant dense<0.000000e+00> : vector<34x128xf32>
    %102 = tpu.matmul %99, %101, %cst_115 {dimension_numbers = #tpu.dot_dimension_numbers<[1], [0], [0], [1], [0, 0, 1, 1], [], []>} : vector<34x128xf32>, vector<128x128xf32>, vector<34x128xf32> -> vector<34x128xf32>
    %c1_116 = arith.constant 1 : index
    %c0_117 = arith.constant 0 : index
    %103 = vector.load %arg6[%c1_116, %c0_117] : memref<36x128xf32, #tpu.memory_space<vmem>>, vector<34x128xf32>
    %c2_118 = arith.constant 2 : index
    %c1_119 = arith.constant 1 : index
    %c0_120 = arith.constant 0 : index
    %c0_121 = arith.constant 0 : index
    %104 = vector.load %arg8[%c2_118, %c1_119, %c0_120, %c0_121] : memref<4x3x128x128xf32, #tpu.memory_space<vmem>>, vector<1x1x128x128xf32>
    %105 = vector.shape_cast %104 : vector<1x1x128x128xf32> to vector<128x128xf32>
    %cst_122 = arith.constant dense<0.000000e+00> : vector<34x128xf32>
    %106 = tpu.matmul %103, %105, %cst_122 {dimension_numbers = #tpu.dot_dimension_numbers<[1], [0], [0], [1], [0, 0, 1, 1], [], []>} : vector<34x128xf32>, vector<128x128xf32>, vector<34x128xf32> -> vector<34x128xf32>
    %107 = arith.addf %102, %106 : vector<34x128xf32>
    %c2_123 = arith.constant 2 : index
    %c0_124 = arith.constant 0 : index
    %108 = vector.load %arg6[%c2_123, %c0_124] : memref<36x128xf32, #tpu.memory_space<vmem>>, vector<34x128xf32>
    %c2_125 = arith.constant 2 : index
    %c2_126 = arith.constant 2 : index
    %c0_127 = arith.constant 0 : index
    %c0_128 = arith.constant 0 : index
    %109 = vector.load %arg8[%c2_125, %c2_126, %c0_127, %c0_128] : memref<4x3x128x128xf32, #tpu.memory_space<vmem>>, vector<1x1x128x128xf32>
    %110 = vector.shape_cast %109 : vector<1x1x128x128xf32> to vector<128x128xf32>
    %cst_129 = arith.constant dense<0.000000e+00> : vector<34x128xf32>
    %111 = tpu.matmul %108, %110, %cst_129 {dimension_numbers = #tpu.dot_dimension_numbers<[1], [0], [0], [1], [0, 0, 1, 1], [], []>} : vector<34x128xf32>, vector<128x128xf32>, vector<34x128xf32> -> vector<34x128xf32>
    %112 = arith.addf %107, %111 : vector<34x128xf32>
    %113 = vector.broadcast %96 : vector<1x128xf32> to vector<34x128xf32>
    %114 = arith.mulf %112, %113 : vector<34x128xf32>
    %115 = vector.broadcast %98 : vector<1x128xf32> to vector<34x128xf32>
    %116 = arith.addf %114, %115 : vector<34x128xf32>
    %cst_130 = arith.constant 0.000000e+00 : f32
    %117 = vector.broadcast %cst_130 : f32 to vector<34x128xf32>
    %118 = arith.maximumf %116, %117 : vector<34x128xf32>
    %119 = vector.extract_strided_slice %118 {offsets = [0, 0], sizes = [16, 128], strides = [1, 1]} : vector<34x128xf32> to vector<16x128xf32>
    %c1_131 = arith.constant 1 : index
    %c0_132 = arith.constant 0 : index
    %120 = vector.load %arg7[%c1_131, %c0_132] : memref<36x128xf32, #tpu.memory_space<vmem>>, vector<16x128xf32>
    tpu.vector_store %arg7[%c1_131, %c0_132], %119 {strides = array<i32>} : memref<36x128xf32, #tpu.memory_space<vmem>>, vector<16x128xf32>,
    %121 = vector.extract_strided_slice %118 {offsets = [18, 0], sizes = [16, 128], strides = [1, 1]} : vector<34x128xf32> to vector<16x128xf32>
    %c19_133 = arith.constant 19 : index
    %c0_134 = arith.constant 0 : index
    %122 = vector.load %arg7[%c19_133, %c0_134] : memref<36x128xf32, #tpu.memory_space<vmem>>, vector<16x128xf32>
    tpu.vector_store %arg7[%c19_133, %c0_134], %121 {strides = array<i32>} : memref<36x128xf32, #tpu.memory_space<vmem>>, vector<16x128xf32>,
    %c4 = arith.constant 4 : index
    %c0_135 = arith.constant 0 : index
    %c0_136 = arith.constant 0 : index
    %123 = vector.load %arg2[%c4, %c0_135, %c0_136] : memref<5x1x128xf32, #tpu.memory_space<vmem>>, vector<1x1x128xf32>
    %124 = vector.shape_cast %123 : vector<1x1x128xf32> to vector<1x128xf32>
    %c4_137 = arith.constant 4 : index
    %c0_138 = arith.constant 0 : index
    %c0_139 = arith.constant 0 : index
    %125 = vector.load %arg3[%c4_137, %c0_138, %c0_139] : memref<5x1x128xf32, #tpu.memory_space<vmem>>, vector<1x1x128xf32>
    %126 = vector.shape_cast %125 : vector<1x1x128xf32> to vector<1x128xf32>
    %c0_140 = arith.constant 0 : index
    %c0_141 = arith.constant 0 : index
    %127 = vector.load %arg7[%c0_140, %c0_141] : memref<36x128xf32, #tpu.memory_space<vmem>>, vector<34x128xf32>
    %c3_142 = arith.constant 3 : index
    %c0_143 = arith.constant 0 : index
    %c0_144 = arith.constant 0 : index
    %c0_145 = arith.constant 0 : index
    %128 = vector.load %arg8[%c3_142, %c0_143, %c0_144, %c0_145] : memref<4x3x128x128xf32, #tpu.memory_space<vmem>>, vector<1x1x128x128xf32>
    %129 = vector.shape_cast %128 : vector<1x1x128x128xf32> to vector<128x128xf32>
    %cst_146 = arith.constant dense<0.000000e+00> : vector<34x128xf32>
    %130 = tpu.matmul %127, %129, %cst_146 {dimension_numbers = #tpu.dot_dimension_numbers<[1], [0], [0], [1], [0, 0, 1, 1], [], []>} : vector<34x128xf32>, vector<128x128xf32>, vector<34x128xf32> -> vector<34x128xf32>
    %c1_147 = arith.constant 1 : index
    %c0_148 = arith.constant 0 : index
    %131 = vector.load %arg7[%c1_147, %c0_148] : memref<36x128xf32, #tpu.memory_space<vmem>>, vector<34x128xf32>
    %c3_149 = arith.constant 3 : index
    %c1_150 = arith.constant 1 : index
    %c0_151 = arith.constant 0 : index
    %c0_152 = arith.constant 0 : index
    %132 = vector.load %arg8[%c3_149, %c1_150, %c0_151, %c0_152] : memref<4x3x128x128xf32, #tpu.memory_space<vmem>>, vector<1x1x128x128xf32>
    %133 = vector.shape_cast %132 : vector<1x1x128x128xf32> to vector<128x128xf32>
    %cst_153 = arith.constant dense<0.000000e+00> : vector<34x128xf32>
    %134 = tpu.matmul %131, %133, %cst_153 {dimension_numbers = #tpu.dot_dimension_numbers<[1], [0], [0], [1], [0, 0, 1, 1], [], []>} : vector<34x128xf32>, vector<128x128xf32>, vector<34x128xf32> -> vector<34x128xf32>
    %135 = arith.addf %130, %134 : vector<34x128xf32>
    %c2_154 = arith.constant 2 : index
    %c0_155 = arith.constant 0 : index
    %136 = vector.load %arg7[%c2_154, %c0_155] : memref<36x128xf32, #tpu.memory_space<vmem>>, vector<34x128xf32>
    %c3_156 = arith.constant 3 : index
    %c2_157 = arith.constant 2 : index
    %c0_158 = arith.constant 0 : index
    %c0_159 = arith.constant 0 : index
    %137 = vector.load %arg8[%c3_156, %c2_157, %c0_158, %c0_159] : memref<4x3x128x128xf32, #tpu.memory_space<vmem>>, vector<1x1x128x128xf32>
    %138 = vector.shape_cast %137 : vector<1x1x128x128xf32> to vector<128x128xf32>
    %cst_160 = arith.constant dense<0.000000e+00> : vector<34x128xf32>
    %139 = tpu.matmul %136, %138, %cst_160 {dimension_numbers = #tpu.dot_dimension_numbers<[1], [0], [0], [1], [0, 0, 1, 1], [], []>} : vector<34x128xf32>, vector<128x128xf32>, vector<34x128xf32> -> vector<34x128xf32>
    %140 = arith.addf %135, %139 : vector<34x128xf32>
    %141 = vector.broadcast %124 : vector<1x128xf32> to vector<34x128xf32>
    %142 = arith.mulf %140, %141 : vector<34x128xf32>
    %143 = vector.broadcast %126 : vector<1x128xf32> to vector<34x128xf32>
    %144 = arith.addf %142, %143 : vector<34x128xf32>
    %c1_161 = arith.constant 1 : index
    %c0_162 = arith.constant 0 : index
    %145 = vector.load %arg6[%c1_161, %c0_162] : memref<36x128xf32, #tpu.memory_space<vmem>>, vector<34x128xf32>
    %146 = arith.addf %144, %145 : vector<34x128xf32>
    %cst_163 = arith.constant 0.000000e+00 : f32
    %147 = vector.broadcast %cst_163 : f32 to vector<34x128xf32>
    %148 = arith.maximumf %146, %147 : vector<34x128xf32>
    %149 = vector.extract_strided_slice %148 {offsets = [0, 0], sizes = [16, 128], strides = [1, 1]} : vector<34x128xf32> to vector<16x128xf32>
    %c0_164 = arith.constant 0 : index
    %c0_165 = arith.constant 0 : index
    %150 = vector.load %arg5[%c0_164, %c0_165] : memref<32x128xf32, #tpu.memory_space<vmem>>, vector<16x128xf32>
    tpu.vector_store %arg5[%c0_164, %c0_165], %149 {strides = array<i32>} : memref<32x128xf32, #tpu.memory_space<vmem>>, vector<16x128xf32>,
    %151 = vector.extract_strided_slice %148 {offsets = [18, 0], sizes = [16, 128], strides = [1, 1]} : vector<34x128xf32> to vector<16x128xf32>
    %c16 = arith.constant 16 : index
    %c0_166 = arith.constant 0 : index
    %152 = vector.load %arg5[%c16, %c0_166] : memref<32x128xf32, #tpu.memory_space<vmem>>, vector<16x128xf32>
    tpu.vector_store %arg5[%c16, %c0_166], %151 {strides = array<i32>} : memref<32x128xf32, #tpu.memory_space<vmem>>, vector<16x128xf32>,
    return
  }
}

</mosaic_0001>

<llo_original>
// kernel: resnet_client_forward.1
$region0: #{resnet_client_forward.1}
  #allocation0 [shape = 'u32[]', space=smem, size = 0x4, offset = 0x4, fixed_abs, tag = 'smem constant byte address 0x4 - core index']
  #allocation1 [shape = 'u32[144,128]{1,0:T(1,128)}', space=vmem, size = 0x12000, scoped, tag = 'internal scratch']
  #allocation2 [shape = 'f32[36,128]{1,0:T(8,128)}', space=vmem, size = 0x5000, scoped, tag = 'scratch operand']
  #allocation3 [shape = 'f32[36,128]{1,0:T(8,128)}', space=vmem, size = 0x5000, scoped, tag = 'scratch operand']
  #allocation4 [shape = 'f32[4,3,128,128]{3,2,1,0:T(8,128)}', space=vmem, size = 0xc0000, scoped, tag = 'scratch operand']
  #allocation5 [shape = 's32[1]{0}', space=sflag, size = 0x4, scoped, tag = 'scratch operand']
  #allocation6 [shape = 's32[]', space=sflag, size = 0x4, offset = 0, fixed_abs, tag = 'sflag constant byte address 0x0 - dummy sync flag']
  #allocation7 [shape = 's32[]', space=sflag, size = 0x4, offset = 0, fixed_abs, tag = 'sflag constant byte address 0x0 - dummy sync flag']
  #allocation8 [shape = 'u32[]', space=smem, size = 0x4, offset = 0x44, fixed_abs, tag = 'smem constant byte address 0x44 - assertion arg 0']
  #allocation9 [shape = 'u32[]', space=smem, size = 0x4, offset = 0x48, fixed_abs, tag = 'smem constant byte address 0x48 - assertion arg 1']
  %s0 = inlined_call_operand.vmem [shape: f32[36,48], index: 0, kind: input, shape index: {}]
  %s1 = inlined_call_operand.vmem [shape: f32[3,48,128], index: 1, kind: input, shape index: {}]
  %s2 = inlined_call_operand.vmem [shape: f32[5,1,128], index: 2, kind: input, shape index: {}]
  %s3 = inlined_call_operand.vmem [shape: f32[5,1,128], index: 3, kind: input, shape index: {}]
  %s4 = inlined_call_operand.hbm [shape: f32[4,3,128,128], index: 4, kind: input, shape index: {}]
  %s5 = inlined_call_operand.vmem [shape: f32[32,128], index: 5, kind: output, shape index: {}]
  %s6 = sld [smem:[#allocation0]]
  $region30: #{resnet_client_forward.1} parent=0
    _
  %s8 = ssub.s32 1, %s6
  %s9 = scalar_select 0, %s8, %s6
  // Predicated region
  $region2: #{resnet_client_forward.1} parent=0 // pred_check
    _
  $region3: #{resnet_client_forward.1} parent=0 // pred_check_branch
    %11 = sbr.rel (0) target = $region5
  $region4: #{resnet_client_forward.1} parent=0 // pred_region
    _
  $region5: #{resnet_client_forward.1} parent=0 // pred_fallthru
    _
  // Predicated region
  $region6: #{resnet_client_forward.1} parent=0 // pred_check
    _
  $region7: #{resnet_client_forward.1} parent=0 // pred_check_branch
    %13 = sbr.rel (0) target = $region9
  $region8: #{resnet_client_forward.1} parent=0 // pred_region
    _
  $region9: #{resnet_client_forward.1} parent=0 // pred_fallthru
    _
  // Predicated region
  $region10: #{resnet_client_forward.1} parent=0 // pred_check
    _
  $region11: #{resnet_client_forward.1} parent=0 // pred_check_branch
    %15 = sbr.rel (0) target = $region13
  $region12: #{resnet_client_forward.1} parent=0 // pred_region
    _
  $region13: #{resnet_client_forward.1} parent=0 // pred_fallthru
    _
  // Predicated region
  $region14: #{resnet_client_forward.1} parent=0 // pred_check
    _
  $region15: #{resnet_client_forward.1} parent=0 // pred_check_branch
    %17 = sbr.rel (0) target = $region17
  $region16: #{resnet_client_forward.1} parent=0 // pred_region
    _
  $region17: #{resnet_client_forward.1} parent=0 // pred_fallthru
    _
  // Predicated region
  $region18: #{resnet_client_forward.1} parent=0 // pred_check
    _
  $region19: #{resnet_client_forward.1} parent=0 // pred_check_branch
    %19 = sbr.rel target = $region21
  $region20: #{resnet_client_forward.1} parent=0 // pred_region
    %20 = sst [smem:[#allocation8]] [#allocation7]
    %21 = sst [smem:[#allocation9]] [#allocation6]
  $region21: #{resnet_client_forward.1} parent=0 // pred_fallthru
    _
  %23 = shalt.err (0)
  %s25 = sshll.u32 [#allocation4], 4
  %s26 = int_to_ptr.vmem [resolvable:$true] %s25
  %28 = dma.hbm_to_vmem [thread:$0]  %s4, 24576, %s26, [#allocation5]
  %29 = vst [vmem:[#allocation2] sm:$0x1] 0.0
  %30 = vst [vmem:[#allocation2 + $0x11] sm:$0x1] 0.0
  %31 = vst [vmem:[#allocation3] sm:$0x1] 0.0
  %32 = vst [vmem:[#allocation3 + $0x11] sm:$0x1] 0.0
  %33 = vst [vmem:[#allocation2 + $0x12] sm:$0x1] 0.0
  %34 = vst [vmem:[#allocation2 + $0x23] sm:$0x1] 0.0
  %35 = vst [vmem:[#allocation3 + $0x12] sm:$0x1] 0.0
  %36 = vst [vmem:[#allocation3 + $0x23] sm:$0x1] 0.0
  %v37 = vld [vmem:[%s2] sm:$0x1]
  %v38 = vld [vmem:[%s3] sm:$0x1]
  %v39 = vld [vmem:[%s0] sm:$0xff]
  %v40 = vld [vmem:[%s0 + $0x8] sm:$0xff]
  %v41 = vld [vmem:[%s0 + $0x10] sm:$0xff]
  %v42 = vld [vmem:[%s0 + $0x18] sm:$0xff]
  %v43 = vld [vmem:[%s0 + $0x20] sm:$0x3]
  %v44 = vld [vmem:[%s1] sm:$0xff]
  %v45 = vld [vmem:[%s1 + $0x8] sm:$0xff]
  %v46 = vld [vmem:[%s1 + $0x10] sm:$0xff]
  %v47 = vld [vmem:[%s1 + $0x18] sm:$0xff]
  %v48 = vld [vmem:[%s1 + $0x20] sm:$0xff]
  %v49 = vld [vmem:[%s1 + $0x28] sm:$0xff]
  %v50 = vld [vmem:[%s0 + $0x1] sm:$0xff]
  %v51 = vld [vmem:[%s0 + $0x9] sm:$0xff]
  %v52 = vld [vmem:[%s0 + $0x11] sm:$0xff]
  %v53 = vld [vmem:[%s0 + $0x19] sm:$0xff]
  %v54 = vld [vmem:[%s0 + $0x21] sm:$0x3]
  %s55 = scalar_lea.vmem %s1, 48
  %v56 = vld [vmem:[%s55] sm:$0xff]
  %v57 = vld [vmem:[%s55 + $0x8] sm:$0xff]
  %v58 = vld [vmem:[%s55 + $0x10] sm:$0xff]
  %v59 = vld [vmem:[%s55 + $0x18] sm:$0xff]
  %v60 = vld [vmem:[%s55 + $0x20] sm:$0xff]
  %v61 = vld [vmem:[%s55 + $0x28] sm:$0xff]
  %vm62 = vcmask 392192
  %v64 = vsel %vm62, %v50, 0
  %v67 = vsel %vm62, %v51, 0
  %v70 = vsel %vm62, %v52, 0
  %v73 = vsel %vm62, %v53, 0
  %v76 = vsel %vm62, %v54, 0
  %78 = vmatprep.subr.mxu0 0.0
  %79 = vmatpush1.msra.mxu0 %v56
  %80 = vmatprep.subr.mxu0 0.0
  %81 = vmatpush1.msra.mxu0 %v57
  %82 = vmatprep.subr.mxu0 0.0
  %83 = vmatpush1.msra.mxu0 %v58
  %84 = vmatprep.subr.mxu0 0.0
  %85 = vmatpush1.msra.mxu0 %v59
  %86 = vmatprep.subr.mxu0 0.0
  %87 = vmatpush1.msra.mxu0 %v60
  %88 = vmatprep.subr.mxu0 0.0
  %89 = vmatpush1.msra.mxu0 %v61
  %90 = vmatprep.subr.mxu0 0.0
  %91 = vmatpush1.msra.mxu0 0.0
  %92 = vmatprep.subr.mxu0 0.0
  %93 = vmatpush1.msra.mxu0 0.0
  %94 = vmatprep.subr.mxu0 0.0
  %95 = vmatpush1.msra.mxu0 0.0
  %96 = vmatprep.subr.mxu0 0.0
  %97 = vmatpush1.msra.mxu0 0.0
  %98 = vmatprep.subr.mxu0 0.0
  %99 = vmatpush1.msra.mxu0 0.0
  %100 = vmatprep.subr.mxu0 0.0
  %101 = vmatpush1.msra.mxu0 0.0
  %102 = vmatprep.subr.mxu0 0.0
  %103 = vmatpush1.msra.mxu0 0.0
  %104 = vmatprep.subr.mxu0 0.0
  %105 = vmatpush1.msra.mxu0 0.0
  %106 = vmatprep.subr.mxu0 0.0
  %107 = vmatpush1.msra.mxu0 0.0
  %108 = vmatprep.subr.mxu0 0.0
  %109 = vmatpush1.msra.mxu0 0.0
  %110 = vmatprep.subr.mxu0 0.0
  %111 = vmatpush1.msra.mxu0 0.0
  %112 = vmatprep.subr.mxu0 0.0
  %113 = vmatpush1.msra.mxu0 0.0
  %114 = vmatprep.subr.mxu0 0.0
  %115 = vmatpush1.msra.mxu0 0.0
  %116 = vmatprep.subr.mxu0 0.0
  %117 = vmatpush1.msra.mxu0 0.0
  %118 = vmatprep.subr.mxu0 0.0
  %119 = vmatpush1.msra.mxu0 0.0
  %120 = vmatprep.subr.mxu0 0.0
  %121 = vmatpush1.msra.mxu0 0.0
  %122 = vmatprep.subr.mxu0 0.0
  %123 = vmatpush1.msra.mxu0 0.0
  %124 = vmatprep.subr.mxu0 0.0
  %125 = vmatpush1.msra.mxu0 0.0
  %126 = vmatprep.subr.mxu0 0.0
  %127 = vmatpush1.msra.mxu0 0.0
  %128 = vmatprep.subr.mxu0 0.0
  %129 = vmatpush1.msra.mxu0 0.0
  %130 = vmatprep.subr.mxu0 0.0
  %131 = vmatpush1.msra.mxu0 0.0
  %132 = vmatprep.subr.mxu0 0.0
  %133 = vmatpush1.msra.mxu0 0.0
  %134 = vmatprep.subr.mxu0 0.0
  %135 = vmatpush1.msra.mxu0 0.0
  %136 = vmatprep.subr.mxu0 0.0
  %137 = vmatpush1.msra.mxu0 0.0
  %138 = vmatprep.subr.mxu0 0.0
  %139 = vmatpush1.msra.mxu0 0.0
  %140 = vmatprep.subr.mxu0 0.0
  %141 = vmatpush1.msra.mxu0 0.0
  %142 = vmatprep.mubr.f32.mxu0 0.0
  %143 = vmatmul.mubr.f32.gmra.mrb[0].mxu0 %v64
  %v144 = vpop.f32.mrb[0].mxu0
  %v145 = vadd.f32 0.0, %v144
  %v146 = vpop.f32.mrb[0].mxu0
  %147 = vmatprep.mubr.f32.mxu0 0.0
  %148 = vmatmul.mubr.f32.gmra.mrb[0].mxu0 %v67
  %v149 = vpop.f32.mrb[0].mxu0
  %v150 = vadd.f32 0.0, %v149
  %v151 = vpop.f32.mrb[0].mxu0
  %152 = vmatprep.mubr.f32.mxu0 0.0
  %153 = vmatmul.mubr.f32.gmra.mrb[0].mxu0 %v70
  %v154 = vpop.f32.mrb[0].mxu0
  %v155 = vadd.f32 0.0, %v154
  %v156 = vpop.f32.mrb[0].mxu0
  %157 = vmatprep.mubr.f32.mxu0 0.0
  %158 = vmatmul.mubr.f32.gmra.mrb[0].mxu0 %v73
  %v159 = vpop.f32.mrb[0].mxu0
  %v160 = vadd.f32 0.0, %v159
  %v161 = vpop.f32.mrb[0].mxu0
  %162 = vmatprep.mubr.f32.mxu0 0.0
  %163 = vmatmul.mubr.f32.gmra.mrb[0].mxu0 %v76
  %v164 = vpop.f32.mrb[0].mxu0
  %v165 = vadd.f32 0.0, %v164
  %v166 = vpop.f32.mrb[0].mxu0
  %167 = vdwg.mxu0
  %v169 = vsel %vm62, %v39, 0
  %v172 = vsel %vm62, %v40, 0
  %v175 = vsel %vm62, %v41, 0
  %v178 = vsel %vm62, %v42, 0
  %v181 = vsel %vm62, %v43, 0
  %183 = vmatprep.subr.mxu0 0.0
  %184 = vmatpush1.msra.mxu0 %v44
  %185 = vmatprep.subr.mxu0 0.0
  %186 = vmatpush1.msra.mxu0 %v45
  %187 = vmatprep.subr.mxu0 0.0
  %188 = vmatpush1.msra.mxu0 %v46
  %189 = vmatprep.subr.mxu0 0.0
  %190 = vmatpush1.msra.mxu0 %v47
  %191 = vmatprep.subr.mxu0 0.0
  %192 = vmatpush1.msra.mxu0 %v48
  %193 = vmatprep.subr.mxu0 0.0
  %194 = vmatpush1.msra.mxu0 %v49
  %195 = vmatprep.subr.mxu0 0.0
  %196 = vmatpush1.msra.mxu0 0.0
  %197 = vmatprep.subr.mxu0 0.0
  %198 = vmatpush1.msra.mxu0 0.0
  %199 = vmatprep.subr.mxu0 0.0
  %200 = vmatpush1.msra.mxu0 0.0
  %201 = vmatprep.subr.mxu0 0.0
  %202 = vmatpush1.msra.mxu0 0.0
  %203 = vmatprep.subr.mxu0 0.0
  %204 = vmatpush1.msra.mxu0 0.0
  %205 = vmatprep.subr.mxu0 0.0
  %206 = vmatpush1.msra.mxu0 0.0
  %207 = vmatprep.subr.mxu0 0.0
  %208 = vmatpush1.msra.mxu0 0.0
  %209 = vmatprep.subr.mxu0 0.0
  %210 = vmatpush1.msra.mxu0 0.0
  %211 = vmatprep.subr.mxu0 0.0
  %212 = vmatpush1.msra.mxu0 0.0
  %213 = vmatprep.subr.mxu0 0.0
  %214 = vmatpush1.msra.mxu0 0.0
  %215 = vmatprep.subr.mxu0 0.0
  %216 = vmatpush1.msra.mxu0 0.0
  %217 = vmatprep.subr.mxu0 0.0
  %218 = vmatpush1.msra.mxu0 0.0
  %219 = vmatprep.subr.mxu0 0.0
  %220 = vmatpush1.msra.mxu0 0.0
  %221 = vmatprep.subr.mxu0 0.0
  %222 = vmatpush1.msra.mxu0 0.0
  %223 = vmatprep.subr.mxu0 0.0
  %224 = vmatpush1.msra.mxu0 0.0
  %225 = vmatprep.subr.mxu0 0.0
  %226 = vmatpush1.msra.mxu0 0.0
  %227 = vmatprep.subr.mxu0 0.0
  %228 = vmatpush1.msra.mxu0 0.0
  %229 = vmatprep.subr.mxu0 0.0
  %230 = vmatpush1.msra.mxu0 0.0
  %231 = vmatprep.subr.mxu0 0.0
  %232 = vmatpush1.msra.mxu0 0.0
  %233 = vmatprep.subr.mxu0 0.0
  %234 = vmatpush1.msra.mxu0 0.0
  %235 = vmatprep.subr.mxu0 0.0
  %236 = vmatpush1.msra.mxu0 0.0
  %237 = vmatprep.subr.mxu0 0.0
  %238 = vmatpush1.msra.mxu0 0.0
  %239 = vmatprep.subr.mxu0 0.0
  %240 = vmatpush1.msra.mxu0 0.0
  %241 = vmatprep.subr.mxu0 0.0
  %242 = vmatpush1.msra.mxu0 0.0
  %243 = vmatprep.subr.mxu0 0.0
  %244 = vmatpush1.msra.mxu0 0.0
  %245 = vmatprep.subr.mxu0 0.0
  %246 = vmatpush1.msra.mxu0 0.0
  %247 = vmatprep.mubr.f32.mxu0 0.0
  %248 = vmatmul.mubr.f32.gmra.mrb[0].mxu0 %v169
  %v249 = vpop.f32.mrb[0].mxu0
  %v250 = vadd.f32 %v145, %v249
  %v251 = vpop.f32.mrb[0].mxu0
  %252 = vmatprep.mubr.f32.mxu0 0.0
  %253 = vmatmul.mubr.f32.gmra.mrb[0].mxu0 %v172
  %v254 = vpop.f32.mrb[0].mxu0
  %v255 = vadd.f32 %v150, %v254
  %v256 = vpop.f32.mrb[0].mxu0
  %257 = vmatprep.mubr.f32.mxu0 0.0
  %258 = vmatmul.mubr.f32.gmra.mrb[0].mxu0 %v175
  %v259 = vpop.f32.mrb[0].mxu0
  %v260 = vadd.f32 %v155, %v259
  %v261 = vpop.f32.mrb[0].mxu0
  %262 = vmatprep.mubr.f32.mxu0 0.0
  %263 = vmatmul.mubr.f32.gmra.mrb[0].mxu0 %v178
  %v264 = vpop.f32.mrb[0].mxu0
  %v265 = vadd.f32 %v160, %v264
  %v266 = vpop.f32.mrb[0].mxu0
  %267 = vmatprep.mubr.f32.mxu0 0.0
  %268 = vmatmul.mubr.f32.gmra.mrb[0].mxu0 %v181
  %v269 = vpop.f32.mrb[0].mxu0
  %v270 = vadd.f32 %v165, %v269
  %v271 = vpop.f32.mrb[0].mxu0
  %272 = vdwg.mxu0
  %v273 = vld [vmem:[%s0 + $0x2] sm:$0xff]
  %v274 = vld [vmem:[%s0 + $0xa] sm:$0xff]
  %v275 = vld [vmem:[%s0 + $0x12] sm:$0xff]
  %v276 = vld [vmem:[%s0 + $0x1a] sm:$0xff]
  %v277 = vld [vmem:[%s0 + $0x22] sm:$0x3]
  %s278 = scalar_lea.vmem %s1, 96
  %v279 = vld [vmem:[%s278] sm:$0xff]
  %v280 = vld [vmem:[%s278 + $0x8] sm:$0xff]
  %v281 = vld [vmem:[%s278 + $0x10] sm:$0xff]
  %v282 = vld [vmem:[%s278 + $0x18] sm:$0xff]
  %v283 = vld [vmem:[%s278 + $0x20] sm:$0xff]
  %v284 = vld [vmem:[%s278 + $0x28] sm:$0xff]
  %v286 = vsel %vm62, %v273, 0
  %v289 = vsel %vm62, %v274, 0
  %v292 = vsel %vm62, %v275, 0
  %v295 = vsel %vm62, %v276, 0
  %v298 = vsel %vm62, %v277, 0
  %300 = vmatprep.subr.mxu0 0.0
  %301 = vmatpush1.msra.mxu0 %v279
  %302 = vmatprep.subr.mxu0 0.0
  %303 = vmatpush1.msra.mxu0 %v280
  %304 = vmatprep.subr.mxu0 0.0
  %305 = vmatpush1.msra.mxu0 %v281
  %306 = vmatprep.subr.mxu0 0.0
  %307 = vmatpush1.msra.mxu0 %v282
  %308 = vmatprep.subr.mxu0 0.0
  %309 = vmatpush1.msra.mxu0 %v283
  %310 = vmatprep.subr.mxu0 0.0
  %311 = vmatpush1.msra.mxu0 %v284
  %312 = vmatprep.subr.mxu0 0.0
  %313 = vmatpush1.msra.mxu0 0.0
  %314 = vmatprep.subr.mxu0 0.0
  %315 = vmatpush1.msra.mxu0 0.0
  %316 = vmatprep.subr.mxu0 0.0
  %317 = vmatpush1.msra.mxu0 0.0
  %318 = vmatprep.subr.mxu0 0.0
  %319 = vmatpush1.msra.mxu0 0.0
  %320 = vmatprep.subr.mxu0 0.0
  %321 = vmatpush1.msra.mxu0 0.0
  %322 = vmatprep.subr.mxu0 0.0
  %323 = vmatpush1.msra.mxu0 0.0
  %324 = vmatprep.subr.mxu0 0.0
  %325 = vmatpush1.msra.mxu0 0.0
  %326 = vmatprep.subr.mxu0 0.0
  %327 = vmatpush1.msra.mxu0 0.0
  %328 = vmatprep.subr.mxu0 0.0
  %329 = vmatpush1.msra.mxu0 0.0
  %330 = vmatprep.subr.mxu0 0.0
  %331 = vmatpush1.msra.mxu0 0.0
  %332 = vmatprep.subr.mxu0 0.0
  %333 = vmatpush1.msra.mxu0 0.0
  %334 = vmatprep.subr.mxu0 0.0
  %335 = vmatpush1.msra.mxu0 0.0
  %336 = vmatprep.subr.mxu0 0.0
  %337 = vmatpush1.msra.mxu0 0.0
  %338 = vmatprep.subr.mxu0 0.0
  %339 = vmatpush1.msra.mxu0 0.0
  %340 = vmatprep.subr.mxu0 0.0
  %341 = vmatpush1.msra.mxu0 0.0
  %342 = vmatprep.subr.mxu0 0.0
  %343 = vmatpush1.msra.mxu0 0.0
  %344 = vmatprep.subr.mxu0 0.0
  %345 = vmatpush1.msra.mxu0 0.0
  %346 = vmatprep.subr.mxu0 0.0
  %347 = vmatpush1.msra.mxu0 0.0
  %348 = vmatprep.subr.mxu0 0.0
  %349 = vmatpush1.msra.mxu0 0.0
  %350 = vmatprep.subr.mxu0 0.0
  %351 = vmatpush1.msra.mxu0 0.0
  %352 = vmatprep.subr.mxu0 0.0
  %353 = vmatpush1.msra.mxu0 0.0
  %354 = vmatprep.subr.mxu0 0.0
  %355 = vmatpush1.msra.mxu0 0.0
  %356 = vmatprep.subr.mxu0 0.0
  %357 = vmatpush1.msra.mxu0 0.0
  %358 = vmatprep.subr.mxu0 0.0
  %359 = vmatpush1.msra.mxu0 0.0
  %360 = vmatprep.subr.mxu0 0.0
  %361 = vmatpush1.msra.mxu0 0.0
  %362 = vmatprep.subr.mxu0 0.0
  %363 = vmatpush1.msra.mxu0 0.0
  %364 = vmatprep.mubr.f32.mxu0 0.0
  %365 = vmatmul.mubr.f32.gmra.mrb[0].mxu0 %v286
  %v366 = vpop.f32.mrb[0].mxu0
  %v367 = vadd.f32 0.0, %v366
  %v368 = vpop.f32.mrb[0].mxu0
  %369 = vmatprep.mubr.f32.mxu0 0.0
  %370 = vmatmul.mubr.f32.gmra.mrb[0].mxu0 %v289
  %v371 = vpop.f32.mrb[0].mxu0
  %v372 = vadd.f32 0.0, %v371
  %v373 = vpop.f32.mrb[0].mxu0
  %374 = vmatprep.mubr.f32.mxu0 0.0
  %375 = vmatmul.mubr.f32.gmra.mrb[0].mxu0 %v292
  %v376 = vpop.f32.mrb[0].mxu0
  %v377 = vadd.f32 0.0, %v376
  %v378 = vpop.f32.mrb[0].mxu0
  %379 = vmatprep.mubr.f32.mxu0 0.0
  %380 = vmatmul.mubr.f32.gmra.mrb[0].mxu0 %v295
  %v381 = vpop.f32.mrb[0].mxu0
  %v382 = vadd.f32 0.0, %v381
  %v383 = vpop.f32.mrb[0].mxu0
  %384 = vmatprep.mubr.f32.mxu0 0.0
  %385 = vmatmul.mubr.f32.gmra.mrb[0].mxu0 %v298
  %v386 = vpop.f32.mrb[0].mxu0
  %v387 = vadd.f32 0.0, %v386
  %v388 = vpop.f32.mrb[0].mxu0
  %389 = vdwg.mxu0
  %v390 = vadd.f32 %v250, %v367
  %v391 = vadd.f32 %v255, %v372
  %v392 = vadd.f32 %v260, %v377
  %v393 = vadd.f32 %v265, %v382
  %v394 = vadd.f32 %v270, %v387
  %v396 = vlaneseq
  %v397 = vshrl.u32 %v396, 7
  %v398 = vsub.s32 0, %v397
  %v399 = vrot.slane %v37, %v398
  %v401 = vmul.f32 %v390, %v399
  %v402 = vmul.f32 %v391, %v399
  %v403 = vmul.f32 %v392, %v399
  %v404 = vmul.f32 %v393, %v399
  %v405 = vmul.f32 %v394, %v399
  %v407 = vlaneseq
  %v408 = vshrl.u32 %v407, 7
  %v409 = vsub.s32 0, %v408
  %v410 = vrot.slane %v38, %v409
  %v412 = vadd.f32 %v401, %v410
  %v413 = vadd.f32 %v402, %v410
  %v414 = vadd.f32 %v403, %v410
  %v415 = vadd.f32 %v404, %v410
  %v416 = vadd.f32 %v405, %v410
  %v417 = vmax.f32 %v412, 0.0
  %v418 = vmax.f32 %v413, 0.0
  %v419 = vmax.f32 %v414, 0.0
  %v420 = vmax.f32 %v415, 0.0
  %v421 = vmax.f32 %v416, 0.0
  %422 = vst [vmem:[#allocation2 + $0x1] sm:$0xff] %v417
  %423 = vst [vmem:[#allocation2 + $0x9] sm:$0xff] %v418
  %424 = vst [vmem:[#allocation2 + $0x11] sm:$0xfc] %v419
  %425 = vst [vmem:[#allocation2 + $0x19] sm:$0xff] %v420
  %426 = vst [vmem:[#allocation2 + $0x21] sm:$0x3] %v421
  %s427 = smul.u32 4, 3
  %s428 = smul.u32 %s427, 128
  %s429 = smul.u32 %s428, 1
  %s430 = sshll.u32 %s429, 4
  %431 = dma.done [#allocation5], %s430
  %s432 = scalar_lea.vmem %s2, 1
  %v433 = vld [vmem:[%s432] sm:$0x1]
  %s434 = scalar_lea.vmem %s3, 1
  %v435 = vld [vmem:[%s434] sm:$0x1]
  %v436 = vld [vmem:[#allocation2] sm:$0xff]
  %v437 = vld [vmem:[#allocation2 + $0x8] sm:$0xff]
  %v438 = vld [vmem:[#allocation2 + $0x10] sm:$0xff]
  %v439 = vld [vmem:[#allocation2 + $0x18] sm:$0xff]
  %v440 = vld [vmem:[#allocation2 + $0x20] sm:$0x3]
  %v441 = vld [vmem:[#allocation4] sm:$0xff]
  %v442 = vld [vmem:[#allocation4 + $0x8] sm:$0xff]
  %v443 = vld [vmem:[#allocation4 + $0x10] sm:$0xff]
  %v444 = vld [vmem:[#allocation4 + $0x18] sm:$0xff]
  %v445 = vld [vmem:[#allocation4 + $0x20] sm:$0xff]
  %v446 = vld [vmem:[#allocation4 + $0x28] sm:$0xff]
  %v447 = vld [vmem:[#allocation4 + $0x30] sm:$0xff]
  %v448 = vld [vmem:[#allocation4 + $0x38] sm:$0xff]
  %v449 = vld [vmem:[#allocation4 + $0x40] sm:$0xff]
  %v450 = vld [vmem:[#allocation4 + $0x48] sm:$0xff]
  %v451 = vld [vmem:[#allocation4 + $0x50] sm:$0xff]
  %v452 = vld [vmem:[#allocation4 + $0x58] sm:$0xff]
  %v453 = vld [vmem:[#allocation4 + $0x60] sm:$0xff]
  %v454 = vld [vmem:[#allocation4 + $0x68] sm:$0xff]
  %v455 = vld [vmem:[#allocation4 + $0x70] sm:$0xff]
  %v456 = vld [vmem:[#allocation4 + $0x78] sm:$0xff]
  %v457 = vld [vmem:[#allocation2 + $0x1] sm:$0xff]
  %v458 = vld [vmem:[#allocation2 + $0x9] sm:$0xff]
  %v459 = vld [vmem:[#allocation2 + $0x11] sm:$0xff]
  %v460 = vld [vmem:[#allocation2 + $0x19] sm:$0xff]
  %v461 = vld [vmem:[#allocation2 + $0x21] sm:$0x3]
  %s462 = scalar_lea.vmem [#allocation4], 128
  %v463 = vld [vmem:[%s462] sm:$0xff]
  %v464 = vld [vmem:[%s462 + $0x8] sm:$0xff]
  %v465 = vld [vmem:[%s462 + $0x10] sm:$0xff]
  %v466 = vld [vmem:[%s462 + $0x18] sm:$0xff]
  %v467 = vld [vmem:[%s462 + $0x20] sm:$0xff]
  %v468 = vld [vmem:[%s462 + $0x28] sm:$0xff]
  %v469 = vld [vmem:[%s462 + $0x30] sm:$0xff]
  %v470 = vld [vmem:[%s462 + $0x38] sm:$0xff]
  %v471 = vld [vmem:[%s462 + $0x40] sm:$0xff]
  %v472 = vld [vmem:[%s462 + $0x48] sm:$0xff]
  %v473 = vld [vmem:[%s462 + $0x50] sm:$0xff]
  %v474 = vld [vmem:[%s462 + $0x58] sm:$0xff]
  %v475 = vld [vmem:[%s462 + $0x60] sm:$0xff]
  %v476 = vld [vmem:[%s462 + $0x68] sm:$0xff]
  %v477 = vld [vmem:[%s462 + $0x70] sm:$0xff]
  %v478 = vld [vmem:[%s462 + $0x78] sm:$0xff]
  %479 = vmatprep.subr.mxu0 0.0
  %480 = vmatpush1.msra.mxu0 %v463
  %481 = vmatprep.subr.mxu0 0.0
  %482 = vmatpush1.msra.mxu0 %v464
  %483 = vmatprep.subr.mxu0 0.0
  %484 = vmatpush1.msra.mxu0 %v465
  %485 = vmatprep.subr.mxu0 0.0
  %486 = vmatpush1.msra.mxu0 %v466
  %487 = vmatprep.subr.mxu0 0.0
  %488 = vmatpush1.msra.mxu0 %v467
  %489 = vmatprep.subr.mxu0 0.0
  %490 = vmatpush1.msra.mxu0 %v468
  %491 = vmatprep.subr.mxu0 0.0
  %492 = vmatpush1.msra.mxu0 %v469
  %493 = vmatprep.subr.mxu0 0.0
  %494 = vmatpush1.msra.mxu0 %v470
  %495 = vmatprep.subr.mxu0 0.0
  %496 = vmatpush1.msra.mxu0 %v471
  %497 = vmatprep.subr.mxu0 0.0
  %498 = vmatpush1.msra.mxu0 %v472
  %499 = vmatprep.subr.mxu0 0.0
  %500 = vmatpush1.msra.mxu0 %v473
  %501 = vmatprep.subr.mxu0 0.0
  %502 = vmatpush1.msra.mxu0 %v474
  %503 = vmatprep.subr.mxu0 0.0
  %504 = vmatpush1.msra.mxu0 %v475
  %505 = vmatprep.subr.mxu0 0.0
  %506 = vmatpush1.msra.mxu0 %v476
  %507 = vmatprep.subr.mxu0 0.0
  %508 = vmatpush1.msra.mxu0 %v477
  %509 = vmatprep.subr.mxu0 0.0
  %510 = vmatpush1.msra.mxu0 %v478
  %511 = vmatprep.subr.mxu0 0.0
  %512 = vmatpush1.msra.mxu0 0.0
  %513 = vmatprep.subr.mxu0 0.0
  %514 = vmatpush1.msra.mxu0 0.0
  %515 = vmatprep.subr.mxu0 0.0
  %516 = vmatpush1.msra.mxu0 0.0
  %517 = vmatprep.subr.mxu0 0.0
  %518 = vmatpush1.msra.mxu0 0.0
  %519 = vmatprep.subr.mxu0 0.0
  %520 = vmatpush1.msra.mxu0 0.0
  %521 = vmatprep.subr.mxu0 0.0
  %522 = vmatpush1.msra.mxu0 0.0
  %523 = vmatprep.subr.mxu0 0.0
  %524 = vmatpush1.msra.mxu0 0.0
  %525 = vmatprep.subr.mxu0 0.0
  %526 = vmatpush1.msra.mxu0 0.0
  %527 = vmatprep.subr.mxu0 0.0
  %528 = vmatpush1.msra.mxu0 0.0
  %529 = vmatprep.subr.mxu0 0.0
  %530 = vmatpush1.msra.mxu0 0.0
  %531 = vmatprep.subr.mxu0 0.0
  %532 = vmatpush1.msra.mxu0 0.0
  %533 = vmatprep.subr.mxu0 0.0
  %534 = vmatpush1.msra.mxu0 0.0
  %535 = vmatprep.subr.mxu0 0.0
  %536 = vmatpush1.msra.mxu0 0.0
  %537 = vmatprep.subr.mxu0 0.0
  %538 = vmatpush1.msra.mxu0 0.0
  %539 = vmatprep.subr.mxu0 0.0
  %540 = vmatpush1.msra.mxu0 0.0
  %541 = vmatprep.subr.mxu0 0.0
  %542 = vmatpush1.msra.mxu0 0.0
  %543 = vmatprep.mubr.f32.mxu0 0.0
  %544 = vmatmul.mubr.f32.gmra.mrb[0].mxu0 %v457
  %v545 = vpop.f32.mrb[0].mxu0
  %v546 = vadd.f32 0.0, %v545
  %v547 = vpop.f32.mrb[0].mxu0
  %548 = vmatprep.mubr.f32.mxu0 0.0
  %549 = vmatmul.mubr.f32.gmra.mrb[0].mxu0 %v458
  %v550 = vpop.f32.mrb[0].mxu0
  %v551 = vadd.f32 0.0, %v550
  %v552 = vpop.f32.mrb[0].mxu0
  %553 = vmatprep.mubr.f32.mxu0 0.0
  %554 = vmatmul.mubr.f32.gmra.mrb[0].mxu0 %v459
  %v555 = vpop.f32.mrb[0].mxu0
  %v556 = vadd.f32 0.0, %v555
  %v557 = vpop.f32.mrb[0].mxu0
  %558 = vmatprep.mubr.f32.mxu0 0.0
  %559 = vmatmul.mubr.f32.gmra.mrb[0].mxu0 %v460
  %v560 = vpop.f32.mrb[0].mxu0
  %v561 = vadd.f32 0.0, %v560
  %v562 = vpop.f32.mrb[0].mxu0
  %563 = vmatprep.mubr.f32.mxu0 0.0
  %564 = vmatmul.mubr.f32.gmra.mrb[0].mxu0 %v461
  %v565 = vpop.f32.mrb[0].mxu0
  %v566 = vadd.f32 0.0, %v565
  %v567 = vpop.f32.mrb[0].mxu0
  %568 = vdwg.mxu0
  %569 = vmatprep.subr.mxu0 0.0
  %570 = vmatpush1.msra.mxu0 %v441
  %571 = vmatprep.subr.mxu0 0.0
  %572 = vmatpush1.msra.mxu0 %v442
  %573 = vmatprep.subr.mxu0 0.0
  %574 = vmatpush1.msra.mxu0 %v443
  %575 = vmatprep.subr.mxu0 0.0
  %576 = vmatpush1.msra.mxu0 %v444
  %577 = vmatprep.subr.mxu0 0.0
  %578 = vmatpush1.msra.mxu0 %v445
  %579 = vmatprep.subr.mxu0 0.0
  %580 = vmatpush1.msra.mxu0 %v446
  %581 = vmatprep.subr.mxu0 0.0
  %582 = vmatpush1.msra.mxu0 %v447
  %583 = vmatprep.subr.mxu0 0.0
  %584 = vmatpush1.msra.mxu0 %v448
  %585 = vmatprep.subr.mxu0 0.0
  %586 = vmatpush1.msra.mxu0 %v449
  %587 = vmatprep.subr.mxu0 0.0
  %588 = vmatpush1.msra.mxu0 %v450
  %589 = vmatprep.subr.mxu0 0.0
  %590 = vmatpush1.msra.mxu0 %v451
  %591 = vmatprep.subr.mxu0 0.0
  %592 = vmatpush1.msra.mxu0 %v452
  %593 = vmatprep.subr.mxu0 0.0
  %594 = vmatpush1.msra.mxu0 %v453
  %595 = vmatprep.subr.mxu0 0.0
  %596 = vmatpush1.msra.mxu0 %v454
  %597 = vmatprep.subr.mxu0 0.0
  %598 = vmatpush1.msra.mxu0 %v455
  %599 = vmatprep.subr.mxu0 0.0
  %600 = vmatpush1.msra.mxu0 %v456
  %601 = vmatprep.subr.mxu0 0.0
  %602 = vmatpush1.msra.mxu0 0.0
  %603 = vmatprep.subr.mxu0 0.0
  %604 = vmatpush1.msra.mxu0 0.0
  %605 = vmatprep.subr.mxu0 0.0
  %606 = vmatpush1.msra.mxu0 0.0
  %607 = vmatprep.subr.mxu0 0.0
  %608 = vmatpush1.msra.mxu0 0.0
  %609 = vmatprep.subr.mxu0 0.0
  %610 = vmatpush1.msra.mxu0 0.0
  %611 = vmatprep.subr.mxu0 0.0
  %612 = vmatpush1.msra.mxu0 0.0
  %613 = vmatprep.subr.mxu0 0.0
  %614 = vmatpush1.msra.mxu0 0.0
  %615 = vmatprep.subr.mxu0 0.0
  %616 = vmatpush1.msra.mxu0 0.0
  %617 = vmatprep.subr.mxu0 0.0
  %618 = vmatpush1.msra.mxu0 0.0
  %619 = vmatprep.subr.mxu0 0.0
  %620 = vmatpush1.msra.mxu0 0.0
  %621 = vmatprep.subr.mxu0 0.0
  %622 = vmatpush1.msra.mxu0 0.0
  %623 = vmatprep.subr.mxu0 0.0
  %624 = vmatpush1.msra.mxu0 0.0
  %625 = vmatprep.subr.mxu0 0.0
  %626 = vmatpush1.msra.mxu0 0.0
  %627 = vmatprep.subr.mxu0 0.0
  %628 = vmatpush1.msra.mxu0 0.0
  %629 = vmatprep.subr.mxu0 0.0
  %630 = vmatpush1.msra.mxu0 0.0
  %631 = vmatprep.subr.mxu0 0.0
  %632 = vmatpush1.msra.mxu0 0.0
  %633 = vmatprep.mubr.f32.mxu0 0.0
  %634 = vmatmul.mubr.f32.gmra.mrb[0].mxu0 %v436
  %v635 = vpop.f32.mrb[0].mxu0
  %v636 = vadd.f32 %v546, %v635
  %v637 = vpop.f32.mrb[0].mxu0
  %638 = vmatprep.mubr.f32.mxu0 0.0
  %639 = vmatmul.mubr.f32.gmra.mrb[0].mxu0 %v437
  %v640 = vpop.f32.mrb[0].mxu0
  %v641 = vadd.f32 %v551, %v640
  %v642 = vpop.f32.mrb[0].mxu0
  %643 = vmatprep.mubr.f32.mxu0 0.0
  %644 = vmatmul.mubr.f32.gmra.mrb[0].mxu0 %v438
  %v645 = vpop.f32.mrb[0].mxu0
  %v646 = vadd.f32 %v556, %v645
  %v647 = vpop.f32.mrb[0].mxu0
  %648 = vmatprep.mubr.f32.mxu0 0.0
  %649 = vmatmul.mubr.f32.gmra.mrb[0].mxu0 %v439
  %v650 = vpop.f32.mrb[0].mxu0
  %v651 = vadd.f32 %v561, %v650
  %v652 = vpop.f32.mrb[0].mxu0
  %653 = vmatprep.mubr.f32.mxu0 0.0
  %654 = vmatmul.mubr.f32.gmra.mrb[0].mxu0 %v440
  %v655 = vpop.f32.mrb[0].mxu0
  %v656 = vadd.f32 %v566, %v655
  %v657 = vpop.f32.mrb[0].mxu0
  %658 = vdwg.mxu0
  %v659 = vld [vmem:[#allocation2 + $0x2] sm:$0xff]
  %v660 = vld [vmem:[#allocation2 + $0xa] sm:$0xff]
  %v661 = vld [vmem:[#allocation2 + $0x12] sm:$0xff]
  %v662 = vld [vmem:[#allocation2 + $0x1a] sm:$0xff]
  %v663 = vld [vmem:[#allocation2 + $0x22] sm:$0x3]
  %s664 = scalar_lea.vmem [#allocation4], 256
  %v665 = vld [vmem:[%s664] sm:$0xff]
  %v666 = vld [vmem:[%s664 + $0x8] sm:$0xff]
  %v667 = vld [vmem:[%s664 + $0x10] sm:$0xff]
  %v668 = vld [vmem:[%s664 + $0x18] sm:$0xff]
  %v669 = vld [vmem:[%s664 + $0x20] sm:$0xff]
  %v670 = vld [vmem:[%s664 + $0x28] sm:$0xff]
  %v671 = vld [vmem:[%s664 + $0x30] sm:$0xff]
  %v672 = vld [vmem:[%s664 + $0x38] sm:$0xff]
  %v673 = vld [vmem:[%s664 + $0x40] sm:$0xff]
  %v674 = vld [vmem:[%s664 + $0x48] sm:$0xff]
  %v675 = vld [vmem:[%s664 + $0x50] sm:$0xff]
  %v676 = vld [vmem:[%s664 + $0x58] sm:$0xff]
  %v677 = vld [vmem:[%s664 + $0x60] sm:$0xff]
  %v678 = vld [vmem:[%s664 + $0x68] sm:$0xff]
  %v679 = vld [vmem:[%s664 + $0x70] sm:$0xff]
  %v680 = vld [vmem:[%s664 + $0x78] sm:$0xff]
  %681 = vmatprep.subr.mxu0 0.0
  %682 = vmatpush1.msra.mxu0 %v665
  %683 = vmatprep.subr.mxu0 0.0
  %684 = vmatpush1.msra.mxu0 %v666
  %685 = vmatprep.subr.mxu0 0.0
  %686 = vmatpush1.msra.mxu0 %v667
  %687 = vmatprep.subr.mxu0 0.0
  %688 = vmatpush1.msra.mxu0 %v668
  %689 = vmatprep.subr.mxu0 0.0
  %690 = vmatpush1.msra.mxu0 %v669
  %691 = vmatprep.subr.mxu0 0.0
  %692 = vmatpush1.msra.mxu0 %v670
  %693 = vmatprep.subr.mxu0 0.0
  %694 = vmatpush1.msra.mxu0 %v671
  %695 = vmatprep.subr.mxu0 0.0
  %696 = vmatpush1.msra.mxu0 %v672
  %697 = vmatprep.subr.mxu0 0.0
  %698 = vmatpush1.msra.mxu0 %v673
  %699 = vmatprep.subr.mxu0 0.0
  %700 = vmatpush1.msra.mxu0 %v674
  %701 = vmatprep.subr.mxu0 0.0
  %702 = vmatpush1.msra.mxu0 %v675
  %703 = vmatprep.subr.mxu0 0.0
  %704 = vmatpush1.msra.mxu0 %v676
  %705 = vmatprep.subr.mxu0 0.0
  %706 = vmatpush1.msra.mxu0 %v677
  %707 = vmatprep.subr.mxu0 0.0
  %708 = vmatpush1.msra.mxu0 %v678
  %709 = vmatprep.subr.mxu0 0.0
  %710 = vmatpush1.msra.mxu0 %v679
  %711 = vmatprep.subr.mxu0 0.0
  %712 = vmatpush1.msra.mxu0 %v680
  %713 = vmatprep.subr.mxu0 0.0
  %714 = vmatpush1.msra.mxu0 0.0
  %715 = vmatprep.subr.mxu0 0.0
  %716 = vmatpush1.msra.mxu0 0.0
  %717 = vmatprep.subr.mxu0 0.0
  %718 = vmatpush1.msra.mxu0 0.0
  %719 = vmatprep.subr.mxu0 0.0
  %720 = vmatpush1.msra.mxu0 0.0
  %721 = vmatprep.subr.mxu0 0.0
  %722 = vmatpush1.msra.mxu0 0.0
  %723 = vmatprep.subr.mxu0 0.0
  %724 = vmatpush1.msra.mxu0 0.0
  %725 = vmatprep.subr.mxu0 0.0
  %726 = vmatpush1.msra.mxu0 0.0
  %727 = vmatprep.subr.mxu0 0.0
  %728 = vmatpush1.msra.mxu0 0.0
  %729 = vmatprep.subr.mxu0 0.0
  %730 = vmatpush1.msra.mxu0 0.0
  %731 = vmatprep.subr.mxu0 0.0
  %732 = vmatpush1.msra.mxu0 0.0
  %733 = vmatprep.subr.mxu0 0.0
  %734 = vmatpush1.msra.mxu0 0.0
  %735 = vmatprep.subr.mxu0 0.0
  %736 = vmatpush1.msra.mxu0 0.0
  %737 = vmatprep.subr.mxu0 0.0
  %738 = vmatpush1.msra.mxu0 0.0
  %739 = vmatprep.subr.mxu0 0.0
  %740 = vmatpush1.msra.mxu0 0.0
  %741 = vmatprep.subr.mxu0 0.0
  %742 = vmatpush1.msra.mxu0 0.0
  %743 = vmatprep.subr.mxu0 0.0
  %744 = vmatpush1.msra.mxu0 0.0
  %745 = vmatprep.mubr.f32.mxu0 0.0
  %746 = vmatmul.mubr.f32.gmra.mrb[0].mxu0 %v659
  %v747 = vpop.f32.mrb[0].mxu0
  %v748 = vadd.f32 0.0, %v747
  %v749 = vpop.f32.mrb[0].mxu0
  %750 = vmatprep.mubr.f32.mxu0 0.0
  %751 = vmatmul.mubr.f32.gmra.mrb[0].mxu0 %v660
  %v752 = vpop.f32.mrb[0].mxu0
  %v753 = vadd.f32 0.0, %v752
  %v754 = vpop.f32.mrb[0].mxu0
  %755 = vmatprep.mubr.f32.mxu0 0.0
  %756 = vmatmul.mubr.f32.gmra.mrb[0].mxu0 %v661
  %v757 = vpop.f32.mrb[0].mxu0
  %v758 = vadd.f32 0.0, %v757
  %v759 = vpop.f32.mrb[0].mxu0
  %760 = vmatprep.mubr.f32.mxu0 0.0
  %761 = vmatmul.mubr.f32.gmra.mrb[0].mxu0 %v662
  %v762 = vpop.f32.mrb[0].mxu0
  %v763 = vadd.f32 0.0, %v762
  %v764 = vpop.f32.mrb[0].mxu0
  %765 = vmatprep.mubr.f32.mxu0 0.0
  %766 = vmatmul.mubr.f32.gmra.mrb[0].mxu0 %v663
  %v767 = vpop.f32.mrb[0].mxu0
  %v768 = vadd.f32 0.0, %v767
  %v769 = vpop.f32.mrb[0].mxu0
  %770 = vdwg.mxu0
  %v771 = vadd.f32 %v636, %v748
  %v772 = vadd.f32 %v641, %v753
  %v773 = vadd.f32 %v646, %v758
  %v774 = vadd.f32 %v651, %v763
  %v775 = vadd.f32 %v656, %v768
  %v777 = vlaneseq
  %v778 = vshrl.u32 %v777, 7
  %v779 = vsub.s32 0, %v778
  %v780 = vrot.slane %v433, %v779
  %v782 = vmul.f32 %v771, %v780
  %v783 = vmul.f32 %v772, %v780
  %v784 = vmul.f32 %v773, %v780
  %v785 = vmul.f32 %v774, %v780
  %v786 = vmul.f32 %v775, %v780
  %v788 = vlaneseq
  %v789 = vshrl.u32 %v788, 7
  %v790 = vsub.s32 0, %v789
  %v791 = vrot.slane %v435, %v790
  %v793 = vadd.f32 %v782, %v791
  %v794 = vadd.f32 %v783, %v791
  %v795 = vadd.f32 %v784, %v791
  %v796 = vadd.f32 %v785, %v791
  %v797 = vadd.f32 %v786, %v791
  %v798 = vmax.f32 %v793, 0.0
  %v799 = vmax.f32 %v794, 0.0
  %v800 = vmax.f32 %v795, 0.0
  %v801 = vmax.f32 %v796, 0.0
  %v802 = vmax.f32 %v797, 0.0
  %803 = vst [vmem:[#allocation3 + $0x1] sm:$0xff] %v798
  %804 = vst [vmem:[#allocation3 + $0x9] sm:$0xff] %v799
  %805 = vst [vmem:[#allocation3 + $0x11] sm:$0xfc] %v800
  %806 = vst [vmem:[#allocation3 + $0x19] sm:$0xff] %v801
  %807 = vst [vmem:[#allocation3 + $0x21] sm:$0x3] %v802
  %s808 = scalar_lea.vmem %s2, 2
  %v809 = vld [vmem:[%s808] sm:$0x1]
  %s810 = scalar_lea.vmem %s3, 2
  %v811 = vld [vmem:[%s810] sm:$0x1]
  %v812 = vld [vmem:[#allocation3] sm:$0xff]
  %v813 = vld [vmem:[#allocation3 + $0x8] sm:$0xff]
  %v814 = vld [vmem:[#allocation3 + $0x10] sm:$0xff]
  %v815 = vld [vmem:[#allocation3 + $0x18] sm:$0xff]
  %v816 = vld [vmem:[#allocation3 + $0x20] sm:$0x3]
  %s817 = scalar_lea.vmem [#allocation4], 384
  %v818 = vld [vmem:[%s817] sm:$0xff]
  %v819 = vld [vmem:[%s817 + $0x8] sm:$0xff]
  %v820 = vld [vmem:[%s817 + $0x10] sm:$0xff]
  %v821 = vld [vmem:[%s817 + $0x18] sm:$0xff]
  %v822 = vld [vmem:[%s817 + $0x20] sm:$0xff]
  %v823 = vld [vmem:[%s817 + $0x28] sm:$0xff]
  %v824 = vld [vmem:[%s817 + $0x30] sm:$0xff]
  %v825 = vld [vmem:[%s817 + $0x38] sm:$0xff]
  %v826 = vld [vmem:[%s817 + $0x40] sm:$0xff]
  %v827 = vld [vmem:[%s817 + $0x48] sm:$0xff]
  %v828 = vld [vmem:[%s817 + $0x50] sm:$0xff]
  %v829 = vld [vmem:[%s817 + $0x58] sm:$0xff]
  %v830 = vld [vmem:[%s817 + $0x60] sm:$0xff]
  %v831 = vld [vmem:[%s817 + $0x68] sm:$0xff]
  %v832 = vld [vmem:[%s817 + $0x70] sm:$0xff]
  %v833 = vld [vmem:[%s817 + $0x78] sm:$0xff]
  %v834 = vld [vmem:[#allocation3 + $0x1] sm:$0xff]
  %v835 = vld [vmem:[#allocation3 + $0x9] sm:$0xff]
  %v836 = vld [vmem:[#allocation3 + $0x11] sm:$0xff]
  %v837 = vld [vmem:[#allocation3 + $0x19] sm:$0xff]
  %v838 = vld [vmem:[#allocation3 + $0x21] sm:$0x3]
  %s839 = scalar_lea.vmem [#allocation4], 512
  %v840 = vld [vmem:[%s839] sm:$0xff]
  %v841 = vld [vmem:[%s839 + $0x8] sm:$0xff]
  %v842 = vld [vmem:[%s839 + $0x10] sm:$0xff]
  %v843 = vld [vmem:[%s839 + $0x18] sm:$0xff]
  %v844 = vld [vmem:[%s839 + $0x20] sm:$0xff]
  %v845 = vld [vmem:[%s839 + $0x28] sm:$0xff]
  %v846 = vld [vmem:[%s839 + $0x30] sm:$0xff]
  %v847 = vld [vmem:[%s839 + $0x38] sm:$0xff]
  %v848 = vld [vmem:[%s839 + $0x40] sm:$0xff]
  %v849 = vld [vmem:[%s839 + $0x48] sm:$0xff]
  %v850 = vld [vmem:[%s839 + $0x50] sm:$0xff]
  %v851 = vld [vmem:[%s839 + $0x58] sm:$0xff]
  %v852 = vld [vmem:[%s839 + $0x60] sm:$0xff]
  %v853 = vld [vmem:[%s839 + $0x68] sm:$0xff]
  %v854 = vld [vmem:[%s839 + $0x70] sm:$0xff]
  %v855 = vld [vmem:[%s839 + $0x78] sm:$0xff]
  %856 = vmatprep.subr.mxu0 0.0
  %857 = vmatpush1.msra.mxu0 %v840
  %858 = vmatprep.subr.mxu0 0.0
  %859 = vmatpush1.msra.mxu0 %v841
  %860 = vmatprep.subr.mxu0 0.0
  %861 = vmatpush1.msra.mxu0 %v842
  %862 = vmatprep.subr.mxu0 0.0
  %863 = vmatpush1.msra.mxu0 %v843
  %864 = vmatprep.subr.mxu0 0.0
  %865 = vmatpush1.msra.mxu0 %v844
  %866 = vmatprep.subr.mxu0 0.0
  %867 = vmatpush1.msra.mxu0 %v845
  %868 = vmatprep.subr.mxu0 0.0
  %869 = vmatpush1.msra.mxu0 %v846
  %870 = vmatprep.subr.mxu0 0.0
  %871 = vmatpush1.msra.mxu0 %v847
  %872 = vmatprep.subr.mxu0 0.0
  %873 = vmatpush1.msra.mxu0 %v848
  %874 = vmatprep.subr.mxu0 0.0
  %875 = vmatpush1.msra.mxu0 %v849
  %876 = vmatprep.subr.mxu0 0.0
  %877 = vmatpush1.msra.mxu0 %v850
  %878 = vmatprep.subr.mxu0 0.0
  %879 = vmatpush1.msra.mxu0 %v851
  %880 = vmatprep.subr.mxu0 0.0
  %881 = vmatpush1.msra.mxu0 %v852
  %882 = vmatprep.subr.mxu0 0.0
  %883 = vmatpush1.msra.mxu0 %v853
  %884 = vmatprep.subr.mxu0 0.0
  %885 = vmatpush1.msra.mxu0 %v854
  %886 = vmatprep.subr.mxu0 0.0
  %887 = vmatpush1.msra.mxu0 %v855
  %888 = vmatprep.subr.mxu0 0.0
  %889 = vmatpush1.msra.mxu0 0.0
  %890 = vmatprep.subr.mxu0 0.0
  %891 = vmatpush1.msra.mxu0 0.0
  %892 = vmatprep.subr.mxu0 0.0
  %893 = vmatpush1.msra.mxu0 0.0
  %894 = vmatprep.subr.mxu0 0.0
  %895 = vmatpush1.msra.mxu0 0.0
  %896 = vmatprep.subr.mxu0 0.0
  %897 = vmatpush1.msra.mxu0 0.0
  %898 = vmatprep.subr.mxu0 0.0
  %899 = vmatpush1.msra.mxu0 0.0
  %900 = vmatprep.subr.mxu0 0.0
  %901 = vmatpush1.msra.mxu0 0.0
  %902 = vmatprep.subr.mxu0 0.0
  %903 = vmatpush1.msra.mxu0 0.0
  %904 = vmatprep.subr.mxu0 0.0
  %905 = vmatpush1.msra.mxu0 0.0
  %906 = vmatprep.subr.mxu0 0.0
  %907 = vmatpush1.msra.mxu0 0.0
  %908 = vmatprep.subr.mxu0 0.0
  %909 = vmatpush1.msra.mxu0 0.0
  %910 = vmatprep.subr.mxu0 0.0
  %911 = vmatpush1.msra.mxu0 0.0
  %912 = vmatprep.subr.mxu0 0.0
  %913 = vmatpush1.msra.mxu0 0.0
  %914 = vmatprep.subr.mxu0 0.0
  %915 = vmatpush1.msra.mxu0 0.0
  %916 = vmatprep.subr.mxu0 0.0
  %917 = vmatpush1.msra.mxu0 0.0
  %918 = vmatprep.subr.mxu0 0.0
  %919 = vmatpush1.msra.mxu0 0.0
  %920 = vmatprep.mubr.f32.mxu0 0.0
  %921 = vmatmul.mubr.f32.gmra.mrb[0].mxu0 %v834
  %v922 = vpop.f32.mrb[0].mxu0
  %v923 = vadd.f32 0.0, %v922
  %v924 = vpop.f32.mrb[0].mxu0
  %925 = vmatprep.mubr.f32.mxu0 0.0
  %926 = vmatmul.mubr.f32.gmra.mrb[0].mxu0 %v835
  %v927 = vpop.f32.mrb[0].mxu0
  %v928 = vadd.f32 0.0, %v927
  %v929 = vpop.f32.mrb[0].mxu0
  %930 = vmatprep.mubr.f32.mxu0 0.0
  %931 = vmatmul.mubr.f32.gmra.mrb[0].mxu0 %v836
  %v932 = vpop.f32.mrb[0].mxu0
  %v933 = vadd.f32 0.0, %v932
  %v934 = vpop.f32.mrb[0].mxu0
  %935 = vmatprep.mubr.f32.mxu0 0.0
  %936 = vmatmul.mubr.f32.gmra.mrb[0].mxu0 %v837
  %v937 = vpop.f32.mrb[0].mxu0
  %v938 = vadd.f32 0.0, %v937
  %v939 = vpop.f32.mrb[0].mxu0
  %940 = vmatprep.mubr.f32.mxu0 0.0
  %941 = vmatmul.mubr.f32.gmra.mrb[0].mxu0 %v838
  %v942 = vpop.f32.mrb[0].mxu0
  %v943 = vadd.f32 0.0, %v942
  %v944 = vpop.f32.mrb[0].mxu0
  %945 = vdwg.mxu0
  %946 = vmatprep.subr.mxu0 0.0
  %947 = vmatpush1.msra.mxu0 %v818
  %948 = vmatprep.subr.mxu0 0.0
  %949 = vmatpush1.msra.mxu0 %v819
  %950 = vmatprep.subr.mxu0 0.0
  %951 = vmatpush1.msra.mxu0 %v820
  %952 = vmatprep.subr.mxu0 0.0
  %953 = vmatpush1.msra.mxu0 %v821
  %954 = vmatprep.subr.mxu0 0.0
  %955 = vmatpush1.msra.mxu0 %v822
  %956 = vmatprep.subr.mxu0 0.0
  %957 = vmatpush1.msra.mxu0 %v823
  %958 = vmatprep.subr.mxu0 0.0
  %959 = vmatpush1.msra.mxu0 %v824
  %960 = vmatprep.subr.mxu0 0.0
  %961 = vmatpush1.msra.mxu0 %v825
  %962 = vmatprep.subr.mxu0 0.0
  %963 = vmatpush1.msra.mxu0 %v826
  %964 = vmatprep.subr.mxu0 0.0
  %965 = vmatpush1.msra.mxu0 %v827
  %966 = vmatprep.subr.mxu0 0.0
  %967 = vmatpush1.msra.mxu0 %v828
  %968 = vmatprep.subr.mxu0 0.0
  %969 = vmatpush1.msra.mxu0 %v829
  %970 = vmatprep.subr.mxu0 0.0
  %971 = vmatpush1.msra.mxu0 %v830
  %972 = vmatprep.subr.mxu0 0.0
  %973 = vmatpush1.msra.mxu0 %v831
  %974 = vmatprep.subr.mxu0 0.0
  %975 = vmatpush1.msra.mxu0 %v832
  %976 = vmatprep.subr.mxu0 0.0
  %977 = vmatpush1.msra.mxu0 %v833
  %978 = vmatprep.subr.mxu0 0.0
  %979 = vmatpush1.msra.mxu0 0.0
  %980 = vmatprep.subr.mxu0 0.0
  %981 = vmatpush1.msra.mxu0 0.0
  %982 = vmatprep.subr.mxu0 0.0
  %983 = vmatpush1.msra.mxu0 0.0
  %984 = vmatprep.subr.mxu0 0.0
  %985 = vmatpush1.msra.mxu0 0.0
  %986 = vmatprep.subr.mxu0 0.0
  %987 = vmatpush1.msra.mxu0 0.0
  %988 = vmatprep.subr.mxu0 0.0
  %989 = vmatpush1.msra.mxu0 0.0
  %990 = vmatprep.subr.mxu0 0.0
  %991 = vmatpush1.msra.mxu0 0.0
  %992 = vmatprep.subr.mxu0 0.0
  %993 = vmatpush1.msra.mxu0 0.0
  %994 = vmatprep.subr.mxu0 0.0
  %995 = vmatpush1.msra.mxu0 0.0
  %996 = vmatprep.subr.mxu0 0.0
  %997 = vmatpush1.msra.mxu0 0.0
  %998 = vmatprep.subr.mxu0 0.0
  %999 = vmatpush1.msra.mxu0 0.0
  %1000 = vmatprep.subr.mxu0 0.0
  %1001 = vmatpush1.msra.mxu0 0.0
  %1002 = vmatprep.subr.mxu0 0.0
  %1003 = vmatpush1.msra.mxu0 0.0
  %1004 = vmatprep.subr.mxu0 0.0
  %1005 = vmatpush1.msra.mxu0 0.0
  %1006 = vmatprep.subr.mxu0 0.0
  %1007 = vmatpush1.msra.mxu0 0.0
  %1008 = vmatprep.subr.mxu0 0.0
  %1009 = vmatpush1.msra.mxu0 0.0
  %1010 = vmatprep.mubr.f32.mxu0 0.0
  %1011 = vmatmul.mubr.f32.gmra.mrb[0].mxu0 %v812
  %v1012 = vpop.f32.mrb[0].mxu0
  %v1013 = vadd.f32 %v923, %v1012
  %v1014 = vpop.f32.mrb[0].mxu0
  %1015 = vmatprep.mubr.f32.mxu0 0.0
  %1016 = vmatmul.mubr.f32.gmra.mrb[0].mxu0 %v813
  %v1017 = vpop.f32.mrb[0].mxu0
  %v1018 = vadd.f32 %v928, %v1017
  %v1019 = vpop.f32.mrb[0].mxu0
  %1020 = vmatprep.mubr.f32.mxu0 0.0
  %1021 = vmatmul.mubr.f32.gmra.mrb[0].mxu0 %v814
  %v1022 = vpop.f32.mrb[0].mxu0
  %v1023 = vadd.f32 %v933, %v1022
  %v1024 = vpop.f32.mrb[0].mxu0
  %1025 = vmatprep.mubr.f32.mxu0 0.0
  %1026 = vmatmul.mubr.f32.gmra.mrb[0].mxu0 %v815
  %v1027 = vpop.f32.mrb[0].mxu0
  %v1028 = vadd.f32 %v938, %v1027
  %v1029 = vpop.f32.mrb[0].mxu0
  %1030 = vmatprep.mubr.f32.mxu0 0.0
  %1031 = vmatmul.mubr.f32.gmra.mrb[0].mxu0 %v816
  %v1032 = vpop.f32.mrb[0].mxu0
  %v1033 = vadd.f32 %v943, %v1032
  %v1034 = vpop.f32.mrb[0].mxu0
  %1035 = vdwg.mxu0
  %v1036 = vld [vmem:[#allocation3 + $0x2] sm:$0xff]
  %v1037 = vld [vmem:[#allocation3 + $0xa] sm:$0xff]
  %v1038 = vld [vmem:[#allocation3 + $0x12] sm:$0xff]
  %v1039 = vld [vmem:[#allocation3 + $0x1a] sm:$0xff]
  %v1040 = vld [vmem:[#allocation3 + $0x22] sm:$0x3]
  %s1041 = scalar_lea.vmem [#allocation4], 640
  %v1042 = vld [vmem:[%s1041] sm:$0xff]
  %v1043 = vld [vmem:[%s1041 + $0x8] sm:$0xff]
  %v1044 = vld [vmem:[%s1041 + $0x10] sm:$0xff]
  %v1045 = vld [vmem:[%s1041 + $0x18] sm:$0xff]
  %v1046 = vld [vmem:[%s1041 + $0x20] sm:$0xff]
  %v1047 = vld [vmem:[%s1041 + $0x28] sm:$0xff]
  %v1048 = vld [vmem:[%s1041 + $0x30] sm:$0xff]
  %v1049 = vld [vmem:[%s1041 + $0x38] sm:$0xff]
  %v1050 = vld [vmem:[%s1041 + $0x40] sm:$0xff]
  %v1051 = vld [vmem:[%s1041 + $0x48] sm:$0xff]
  %v1052 = vld [vmem:[%s1041 + $0x50] sm:$0xff]
  %v1053 = vld [vmem:[%s1041 + $0x58] sm:$0xff]
  %v1054 = vld [vmem:[%s1041 + $0x60] sm:$0xff]
  %v1055 = vld [vmem:[%s1041 + $0x68] sm:$0xff]
  %v1056 = vld [vmem:[%s1041 + $0x70] sm:$0xff]
  %v1057 = vld [vmem:[%s1041 + $0x78] sm:$0xff]
  %1058 = vmatprep.subr.mxu0 0.0
  %1059 = vmatpush1.msra.mxu0 %v1042
  %1060 = vmatprep.subr.mxu0 0.0
  %1061 = vmatpush1.msra.mxu0 %v1043
  %1062 = vmatprep.subr.mxu0 0.0
  %1063 = vmatpush1.msra.mxu0 %v1044
  %1064 = vmatprep.subr.mxu0 0.0
  %1065 = vmatpush1.msra.mxu0 %v1045
  %1066 = vmatprep.subr.mxu0 0.0
  %1067 = vmatpush1.msra.mxu0 %v1046
  %1068 = vmatprep.subr.mxu0 0.0
  %1069 = vmatpush1.msra.mxu0 %v1047
  %1070 = vmatprep.subr.mxu0 0.0
  %1071 = vmatpush1.msra.mxu0 %v1048
  %1072 = vmatprep.subr.mxu0 0.0
  %1073 = vmatpush1.msra.mxu0 %v1049
  %1074 = vmatprep.subr.mxu0 0.0
  %1075 = vmatpush1.msra.mxu0 %v1050
  %1076 = vmatprep.subr.mxu0 0.0
  %1077 = vmatpush1.msra.mxu0 %v1051
  %1078 = vmatprep.subr.mxu0 0.0
  %1079 = vmatpush1.msra.mxu0 %v1052
  %1080 = vmatprep.subr.mxu0 0.0
  %1081 = vmatpush1.msra.mxu0 %v1053
  %1082 = vmatprep.subr.mxu0 0.0
  %1083 = vmatpush1.msra.mxu0 %v1054
  %1084 = vmatprep.subr.mxu0 0.0
  %1085 = vmatpush1.msra.mxu0 %v1055
  %1086 = vmatprep.subr.mxu0 0.0
  %1087 = vmatpush1.msra.mxu0 %v1056
  %1088 = vmatprep.subr.mxu0 0.0
  %1089 = vmatpush1.msra.mxu0 %v1057
  %1090 = vmatprep.subr.mxu0 0.0
  %1091 = vmatpush1.msra.mxu0 0.0
  %1092 = vmatprep.subr.mxu0 0.0
  %1093 = vmatpush1.msra.mxu0 0.0
  %1094 = vmatprep.subr.mxu0 0.0
  %1095 = vmatpush1.msra.mxu0 0.0
  %1096 = vmatprep.subr.mxu0 0.0
  %1097 = vmatpush1.msra.mxu0 0.0
  %1098 = vmatprep.subr.mxu0 0.0
  %1099 = vmatpush1.msra.mxu0 0.0
  %1100 = vmatprep.subr.mxu0 0.0
  %1101 = vmatpush1.msra.mxu0 0.0
  %1102 = vmatprep.subr.mxu0 0.0
  %1103 = vmatpush1.msra.mxu0 0.0
  %1104 = vmatprep.subr.mxu0 0.0
  %1105 = vmatpush1.msra.mxu0 0.0
  %1106 = vmatprep.subr.mxu0 0.0
  %1107 = vmatpush1.msra.mxu0 0.0
  %1108 = vmatprep.subr.mxu0 0.0
  %1109 = vmatpush1.msra.mxu0 0.0
  %1110 = vmatprep.subr.mxu0 0.0
  %1111 = vmatpush1.msra.mxu0 0.0
  %1112 = vmatprep.subr.mxu0 0.0
  %1113 = vmatpush1.msra.mxu0 0.0
  %1114 = vmatprep.subr.mxu0 0.0
  %1115 = vmatpush1.msra.mxu0 0.0
  %1116 = vmatprep.subr.mxu0 0.0
  %1117 = vmatpush1.msra.mxu0 0.0
  %1118 = vmatprep.subr.mxu0 0.0
  %1119 = vmatpush1.msra.mxu0 0.0
  %1120 = vmatprep.subr.mxu0 0.0
  %1121 = vmatpush1.msra.mxu0 0.0
  %1122 = vmatprep.mubr.f32.mxu0 0.0
  %1123 = vmatmul.mubr.f32.gmra.mrb[0].mxu0 %v1036
  %v1124 = vpop.f32.mrb[0].mxu0
  %v1125 = vadd.f32 0.0, %v1124
  %v1126 = vpop.f32.mrb[0].mxu0
  %1127 = vmatprep.mubr.f32.mxu0 0.0
  %1128 = vmatmul.mubr.f32.gmra.mrb[0].mxu0 %v1037
  %v1129 = vpop.f32.mrb[0].mxu0
  %v1130 = vadd.f32 0.0, %v1129
  %v1131 = vpop.f32.mrb[0].mxu0
  %1132 = vmatprep.mubr.f32.mxu0 0.0
  %1133 = vmatmul.mubr.f32.gmra.mrb[0].mxu0 %v1038
  %v1134 = vpop.f32.mrb[0].mxu0
  %v1135 = vadd.f32 0.0, %v1134
  %v1136 = vpop.f32.mrb[0].mxu0
  %1137 = vmatprep.mubr.f32.mxu0 0.0
  %1138 = vmatmul.mubr.f32.gmra.mrb[0].mxu0 %v1039
  %v1139 = vpop.f32.mrb[0].mxu0
  %v1140 = vadd.f32 0.0, %v1139
  %v1141 = vpop.f32.mrb[0].mxu0
  %1142 = vmatprep.mubr.f32.mxu0 0.0
  %1143 = vmatmul.mubr.f32.gmra.mrb[0].mxu0 %v1040
  %v1144 = vpop.f32.mrb[0].mxu0
  %v1145 = vadd.f32 0.0, %v1144
  %v1146 = vpop.f32.mrb[0].mxu0
  %1147 = vdwg.mxu0
  %v1148 = vadd.f32 %v1013, %v1125
  %v1149 = vadd.f32 %v1018, %v1130
  %v1150 = vadd.f32 %v1023, %v1135
  %v1151 = vadd.f32 %v1028, %v1140
  %v1152 = vadd.f32 %v1033, %v1145
  %v1154 = vlaneseq
  %v1155 = vshrl.u32 %v1154, 7
  %v1156 = vsub.s32 0, %v1155
  %v1157 = vrot.slane %v809, %v1156
  %v1159 = vmul.f32 %v1148, %v1157
  %v1160 = vmul.f32 %v1149, %v1157
  %v1161 = vmul.f32 %v1150, %v1157
  %v1162 = vmul.f32 %v1151, %v1157
  %v1163 = vmul.f32 %v1152, %v1157
  %v1165 = vlaneseq
  %v1166 = vshrl.u32 %v1165, 7
  %v1167 = vsub.s32 0, %v1166
  %v1168 = vrot.slane %v811, %v1167
  %v1170 = vadd.f32 %v1159, %v1168
  %v1171 = vadd.f32 %v1160, %v1168
  %v1172 = vadd.f32 %v1161, %v1168
  %v1173 = vadd.f32 %v1162, %v1168
  %v1174 = vadd.f32 %v1163, %v1168
  %v1175 = vld [vmem:[#allocation2 + $0x1] sm:$0xff]
  %v1176 = vld [vmem:[#allocation2 + $0x9] sm:$0xff]
  %v1177 = vld [vmem:[#allocation2 + $0x11] sm:$0xff]
  %v1178 = vld [vmem:[#allocation2 + $0x19] sm:$0xff]
  %v1179 = vld [vmem:[#allocation2 + $0x21] sm:$0x3]
  %v1180 = vadd.f32 %v1170, %v1175
  %v1181 = vadd.f32 %v1171, %v1176
  %v1182 = vadd.f32 %v1172, %v1177
  %v1183 = vadd.f32 %v1173, %v1178
  %v1184 = vadd.f32 %v1174, %v1179
  %v1185 = vmax.f32 %v1180, 0.0
  %v1186 = vmax.f32 %v1181, 0.0
  %v1187 = vmax.f32 %v1182, 0.0
  %v1188 = vmax.f32 %v1183, 0.0
  %v1189 = vmax.f32 %v1184, 0.0
  %1190 = vst [vmem:[#allocation2 + $0x1] sm:$0xff] %v1185
  %1191 = vst [vmem:[#allocation2 + $0x9] sm:$0xff] %v1186
  %1192 = vst [vmem:[#allocation2 + $0x11] sm:$0xfc] %v1187
  %1193 = vst [vmem:[#allocation2 + $0x19] sm:$0xff] %v1188
  %1194 = vst [vmem:[#allocation2 + $0x21] sm:$0x3] %v1189
  %s1195 = scalar_lea.vmem %s2, 3
  %v1196 = vld [vmem:[%s1195] sm:$0x1]
  %s1197 = scalar_lea.vmem %s3, 3
  %v1198 = vld [vmem:[%s1197] sm:$0x1]
  %v1199 = vld [vmem:[#allocation2] sm:$0xff]
  %v1200 = vld [vmem:[#allocation2 + $0x8] sm:$0xff]
  %v1201 = vld [vmem:[#allocation2 + $0x10] sm:$0xff]
  %v1202 = vld [vmem:[#allocation2 + $0x18] sm:$0xff]
  %v1203 = vld [vmem:[#allocation2 + $0x20] sm:$0x3]
  %s1204 = scalar_lea.vmem [#allocation4], 768
  %v1205 = vld [vmem:[%s1204] sm:$0xff]
  %v1206 = vld [vmem:[%s1204 + $0x8] sm:$0xff]
  %v1207 = vld [vmem:[%s1204 + $0x10] sm:$0xff]
  %v1208 = vld [vmem:[%s1204 + $0x18] sm:$0xff]
  %v1209 = vld [vmem:[%s1204 + $0x20] sm:$0xff]
  %v1210 = vld [vmem:[%s1204 + $0x28] sm:$0xff]
  %v1211 = vld [vmem:[%s1204 + $0x30] sm:$0xff]
  %v1212 = vld [vmem:[%s1204 + $0x38] sm:$0xff]
  %v1213 = vld [vmem:[%s1204 + $0x40] sm:$0xff]
  %v1214 = vld [vmem:[%s1204 + $0x48] sm:$0xff]
  %v1215 = vld [vmem:[%s1204 + $0x50] sm:$0xff]
  %v1216 = vld [vmem:[%s1204 + $0x58] sm:$0xff]
  %v1217 = vld [vmem:[%s1204 + $0x60] sm:$0xff]
  %v1218 = vld [vmem:[%s1204 + $0x68] sm:$0xff]
  %v1219 = vld [vmem:[%s1204 + $0x70] sm:$0xff]
  %v1220 = vld [vmem:[%s1204 + $0x78] sm:$0xff]
  %v1221 = vld [vmem:[#allocation2 + $0x1] sm:$0xff]
  %v1222 = vld [vmem:[#allocation2 + $0x9] sm:$0xff]
  %v1223 = vld [vmem:[#allocation2 + $0x11] sm:$0xff]
  %v1224 = vld [vmem:[#allocation2 + $0x19] sm:$0xff]
  %v1225 = vld [vmem:[#allocation2 + $0x21] sm:$0x3]
  %s1226 = scalar_lea.vmem [#allocation4], 896
  %v1227 = vld [vmem:[%s1226] sm:$0xff]
  %v1228 = vld [vmem:[%s1226 + $0x8] sm:$0xff]
  %v1229 = vld [vmem:[%s1226 + $0x10] sm:$0xff]
  %v1230 = vld [vmem:[%s1226 + $0x18] sm:$0xff]
  %v1231 = vld [vmem:[%s1226 + $0x20] sm:$0xff]
  %v1232 = vld [vmem:[%s1226 + $0x28] sm:$0xff]
  %v1233 = vld [vmem:[%s1226 + $0x30] sm:$0xff]
  %v1234 = vld [vmem:[%s1226 + $0x38] sm:$0xff]
  %v1235 = vld [vmem:[%s1226 + $0x40] sm:$0xff]
  %v1236 = vld [vmem:[%s1226 + $0x48] sm:$0xff]
  %v1237 = vld [vmem:[%s1226 + $0x50] sm:$0xff]
  %v1238 = vld [vmem:[%s1226 + $0x58] sm:$0xff]
  %v1239 = vld [vmem:[%s1226 + $0x60] sm:$0xff]
  %v1240 = vld [vmem:[%s1226 + $0x68] sm:$0xff]
  %v1241 = vld [vmem:[%s1226 + $0x70] sm:$0xff]
  %v1242 = vld [vmem:[%s1226 + $0x78] sm:$0xff]
  %1243 = vmatprep.subr.mxu0 0.0
  %1244 = vmatpush1.msra.mxu0 %v1227
  %1245 = vmatprep.subr.mxu0 0.0
  %1246 = vmatpush1.msra.mxu0 %v1228
  %1247 = vmatprep.subr.mxu0 0.0
  %1248 = vmatpush1.msra.mxu0 %v1229
  %1249 = vmatprep.subr.mxu0 0.0
  %1250 = vmatpush1.msra.mxu0 %v1230
  %1251 = vmatprep.subr.mxu0 0.0
  %1252 = vmatpush1.msra.mxu0 %v1231
  %1253 = vmatprep.subr.mxu0 0.0
  %1254 = vmatpush1.msra.mxu0 %v1232
  %1255 = vmatprep.subr.mxu0 0.0
  %1256 = vmatpush1.msra.mxu0 %v1233
  %1257 = vmatprep.subr.mxu0 0.0
  %1258 = vmatpush1.msra.mxu0 %v1234
  %1259 = vmatprep.subr.mxu0 0.0
  %1260 = vmatpush1.msra.mxu0 %v1235
  %1261 = vmatprep.subr.mxu0 0.0
  %1262 = vmatpush1.msra.mxu0 %v1236
  %1263 = vmatprep.subr.mxu0 0.0
  %1264 = vmatpush1.msra.mxu0 %v1237
  %1265 = vmatprep.subr.mxu0 0.0
  %1266 = vmatpush1.msra.mxu0 %v1238
  %1267 = vmatprep.subr.mxu0 0.0
  %1268 = vmatpush1.msra.mxu0 %v1239
  %1269 = vmatprep.subr.mxu0 0.0
  %1270 = vmatpush1.msra.mxu0 %v1240
  %1271 = vmatprep.subr.mxu0 0.0
  %1272 = vmatpush1.msra.mxu0 %v1241
  %1273 = vmatprep.subr.mxu0 0.0
  %1274 = vmatpush1.msra.mxu0 %v1242
  %1275 = vmatprep.subr.mxu0 0.0
  %1276 = vmatpush1.msra.mxu0 0.0
  %1277 = vmatprep.subr.mxu0 0.0
  %1278 = vmatpush1.msra.mxu0 0.0
  %1279 = vmatprep.subr.mxu0 0.0
  %1280 = vmatpush1.msra.mxu0 0.0
  %1281 = vmatprep.subr.mxu0 0.0
  %1282 = vmatpush1.msra.mxu0 0.0
  %1283 = vmatprep.subr.mxu0 0.0
  %1284 = vmatpush1.msra.mxu0 0.0
  %1285 = vmatprep.subr.mxu0 0.0
  %1286 = vmatpush1.msra.mxu0 0.0
  %1287 = vmatprep.subr.mxu0 0.0
  %1288 = vmatpush1.msra.mxu0 0.0
  %1289 = vmatprep.subr.mxu0 0.0
  %1290 = vmatpush1.msra.mxu0 0.0
  %1291 = vmatprep.subr.mxu0 0.0
  %1292 = vmatpush1.msra.mxu0 0.0
  %1293 = vmatprep.subr.mxu0 0.0
  %1294 = vmatpush1.msra.mxu0 0.0
  %1295 = vmatprep.subr.mxu0 0.0
  %1296 = vmatpush1.msra.mxu0 0.0
  %1297 = vmatprep.subr.mxu0 0.0
  %1298 = vmatpush1.msra.mxu0 0.0
  %1299 = vmatprep.subr.mxu0 0.0
  %1300 = vmatpush1.msra.mxu0 0.0
  %1301 = vmatprep.subr.mxu0 0.0
  %1302 = vmatpush1.msra.mxu0 0.0
  %1303 = vmatprep.subr.mxu0 0.0
  %1304 = vmatpush1.msra.mxu0 0.0
  %1305 = vmatprep.subr.mxu0 0.0
  %1306 = vmatpush1.msra.mxu0 0.0
  %1307 = vmatprep.mubr.f32.mxu0 0.0
  %1308 = vmatmul.mubr.f32.gmra.mrb[0].mxu0 %v1221
  %v1309 = vpop.f32.mrb[0].mxu0
  %v1310 = vadd.f32 0.0, %v1309
  %v1311 = vpop.f32.mrb[0].mxu0
  %1312 = vmatprep.mubr.f32.mxu0 0.0
  %1313 = vmatmul.mubr.f32.gmra.mrb[0].mxu0 %v1222
  %v1314 = vpop.f32.mrb[0].mxu0
  %v1315 = vadd.f32 0.0, %v1314
  %v1316 = vpop.f32.mrb[0].mxu0
  %1317 = vmatprep.mubr.f32.mxu0 0.0
  %1318 = vmatmul.mubr.f32.gmra.mrb[0].mxu0 %v1223
  %v1319 = vpop.f32.mrb[0].mxu0
  %v1320 = vadd.f32 0.0, %v1319
  %v1321 = vpop.f32.mrb[0].mxu0
  %1322 = vmatprep.mubr.f32.mxu0 0.0
  %1323 = vmatmul.mubr.f32.gmra.mrb[0].mxu0 %v1224
  %v1324 = vpop.f32.mrb[0].mxu0
  %v1325 = vadd.f32 0.0, %v1324
  %v1326 = vpop.f32.mrb[0].mxu0
  %1327 = vmatprep.mubr.f32.mxu0 0.0
  %1328 = vmatmul.mubr.f32.gmra.mrb[0].mxu0 %v1225
  %v1329 = vpop.f32.mrb[0].mxu0
  %v1330 = vadd.f32 0.0, %v1329
  %v1331 = vpop.f32.mrb[0].mxu0
  %1332 = vdwg.mxu0
  %1333 = vmatprep.subr.mxu0 0.0
  %1334 = vmatpush1.msra.mxu0 %v1205
  %1335 = vmatprep.subr.mxu0 0.0
  %1336 = vmatpush1.msra.mxu0 %v1206
  %1337 = vmatprep.subr.mxu0 0.0
  %1338 = vmatpush1.msra.mxu0 %v1207
  %1339 = vmatprep.subr.mxu0 0.0
  %1340 = vmatpush1.msra.mxu0 %v1208
  %1341 = vmatprep.subr.mxu0 0.0
  %1342 = vmatpush1.msra.mxu0 %v1209
  %1343 = vmatprep.subr.mxu0 0.0
  %1344 = vmatpush1.msra.mxu0 %v1210
  %1345 = vmatprep.subr.mxu0 0.0
  %1346 = vmatpush1.msra.mxu0 %v1211
  %1347 = vmatprep.subr.mxu0 0.0
  %1348 = vmatpush1.msra.mxu0 %v1212
  %1349 = vmatprep.subr.mxu0 0.0
  %1350 = vmatpush1.msra.mxu0 %v1213
  %1351 = vmatprep.subr.mxu0 0.0
  %1352 = vmatpush1.msra.mxu0 %v1214
  %1353 = vmatprep.subr.mxu0 0.0
  %1354 = vmatpush1.msra.mxu0 %v1215
  %1355 = vmatprep.subr.mxu0 0.0
  %1356 = vmatpush1.msra.mxu0 %v1216
  %1357 = vmatprep.subr.mxu0 0.0
  %1358 = vmatpush1.msra.mxu0 %v1217
  %1359 = vmatprep.subr.mxu0 0.0
  %1360 = vmatpush1.msra.mxu0 %v1218
  %1361 = vmatprep.subr.mxu0 0.0
  %1362 = vmatpush1.msra.mxu0 %v1219
  %1363 = vmatprep.subr.mxu0 0.0
  %1364 = vmatpush1.msra.mxu0 %v1220
  %1365 = vmatprep.subr.mxu0 0.0
  %1366 = vmatpush1.msra.mxu0 0.0
  %1367 = vmatprep.subr.mxu0 0.0
  %1368 = vmatpush1.msra.mxu0 0.0
  %1369 = vmatprep.subr.mxu0 0.0
  %1370 = vmatpush1.msra.mxu0 0.0
  %1371 = vmatprep.subr.mxu0 0.0
  %1372 = vmatpush1.msra.mxu0 0.0
  %1373 = vmatprep.subr.mxu0 0.0
  %1374 = vmatpush1.msra.mxu0 0.0
  %1375 = vmatprep.subr.mxu0 0.0
  %1376 = vmatpush1.msra.mxu0 0.0
  %1377 = vmatprep.subr.mxu0 0.0
  %1378 = vmatpush1.msra.mxu0 0.0
  %1379 = vmatprep.subr.mxu0 0.0
  %1380 = vmatpush1.msra.mxu0 0.0
  %1381 = vmatprep.subr.mxu0 0.0
  %1382 = vmatpush1.msra.mxu0 0.0
  %1383 = vmatprep.subr.mxu0 0.0
  %1384 = vmatpush1.msra.mxu0 0.0
  %1385 = vmatprep.subr.mxu0 0.0
  %1386 = vmatpush1.msra.mxu0 0.0
  %1387 = vmatprep.subr.mxu0 0.0
  %1388 = vmatpush1.msra.mxu0 0.0
  %1389 = vmatprep.subr.mxu0 0.0
  %1390 = vmatpush1.msra.mxu0 0.0
  %1391 = vmatprep.subr.mxu0 0.0
  %1392 = vmatpush1.msra.mxu0 0.0
  %1393 = vmatprep.subr.mxu0 0.0
  %1394 = vmatpush1.msra.mxu0 0.0
  %1395 = vmatprep.subr.mxu0 0.0
  %1396 = vmatpush1.msra.mxu0 0.0
  %1397 = vmatprep.mubr.f32.mxu0 0.0
  %1398 = vmatmul.mubr.f32.gmra.mrb[0].mxu0 %v1199
  %v1399 = vpop.f32.mrb[0].mxu0
  %v1400 = vadd.f32 %v1310, %v1399
  %v1401 = vpop.f32.mrb[0].mxu0
  %1402 = vmatprep.mubr.f32.mxu0 0.0
  %1403 = vmatmul.mubr.f32.gmra.mrb[0].mxu0 %v1200
  %v1404 = vpop.f32.mrb[0].mxu0
  %v1405 = vadd.f32 %v1315, %v1404
  %v1406 = vpop.f32.mrb[0].mxu0
  %1407 = vmatprep.mubr.f32.mxu0 0.0
  %1408 = vmatmul.mubr.f32.gmra.mrb[0].mxu0 %v1201
  %v1409 = vpop.f32.mrb[0].mxu0
  %v1410 = vadd.f32 %v1320, %v1409
  %v1411 = vpop.f32.mrb[0].mxu0
  %1412 = vmatprep.mubr.f32.mxu0 0.0
  %1413 = vmatmul.mubr.f32.gmra.mrb[0].mxu0 %v1202
  %v1414 = vpop.f32.mrb[0].mxu0
  %v1415 = vadd.f32 %v1325, %v1414
  %v1416 = vpop.f32.mrb[0].mxu0
  %1417 = vmatprep.mubr.f32.mxu0 0.0
  %1418 = vmatmul.mubr.f32.gmra.mrb[0].mxu0 %v1203
  %v1419 = vpop.f32.mrb[0].mxu0
  %v1420 = vadd.f32 %v1330, %v1419
  %v1421 = vpop.f32.mrb[0].mxu0
  %1422 = vdwg.mxu0
  %v1423 = vld [vmem:[#allocation2 + $0x2] sm:$0xff]
  %v1424 = vld [vmem:[#allocation2 + $0xa] sm:$0xff]
  %v1425 = vld [vmem:[#allocation2 + $0x12] sm:$0xff]
  %v1426 = vld [vmem:[#allocation2 + $0x1a] sm:$0xff]
  %v1427 = vld [vmem:[#allocation2 + $0x22] sm:$0x3]
  %s1428 = scalar_lea.vmem [#allocation4], 1024
  %v1429 = vld [vmem:[%s1428] sm:$0xff]
  %v1430 = vld [vmem:[%s1428 + $0x8] sm:$0xff]
  %v1431 = vld [vmem:[%s1428 + $0x10] sm:$0xff]
  %v1432 = vld [vmem:[%s1428 + $0x18] sm:$0xff]
  %v1433 = vld [vmem:[%s1428 + $0x20] sm:$0xff]
  %v1434 = vld [vmem:[%s1428 + $0x28] sm:$0xff]
  %v1435 = vld [vmem:[%s1428 + $0x30] sm:$0xff]
  %v1436 = vld [vmem:[%s1428 + $0x38] sm:$0xff]
  %v1437 = vld [vmem:[%s1428 + $0x40] sm:$0xff]
  %v1438 = vld [vmem:[%s1428 + $0x48] sm:$0xff]
  %v1439 = vld [vmem:[%s1428 + $0x50] sm:$0xff]
  %v1440 = vld [vmem:[%s1428 + $0x58] sm:$0xff]
  %v1441 = vld [vmem:[%s1428 + $0x60] sm:$0xff]
  %v1442 = vld [vmem:[%s1428 + $0x68] sm:$0xff]
  %v1443 = vld [vmem:[%s1428 + $0x70] sm:$0xff]
  %v1444 = vld [vmem:[%s1428 + $0x78] sm:$0xff]
  %1445 = vmatprep.subr.mxu0 0.0
  %1446 = vmatpush1.msra.mxu0 %v1429
  %1447 = vmatprep.subr.mxu0 0.0
  %1448 = vmatpush1.msra.mxu0 %v1430
  %1449 = vmatprep.subr.mxu0 0.0
  %1450 = vmatpush1.msra.mxu0 %v1431
  %1451 = vmatprep.subr.mxu0 0.0
  %1452 = vmatpush1.msra.mxu0 %v1432
  %1453 = vmatprep.subr.mxu0 0.0
  %1454 = vmatpush1.msra.mxu0 %v1433
  %1455 = vmatprep.subr.mxu0 0.0
  %1456 = vmatpush1.msra.mxu0 %v1434
  %1457 = vmatprep.subr.mxu0 0.0
  %1458 = vmatpush1.msra.mxu0 %v1435
  %1459 = vmatprep.subr.mxu0 0.0
  %1460 = vmatpush1.msra.mxu0 %v1436
  %1461 = vmatprep.subr.mxu0 0.0
  %1462 = vmatpush1.msra.mxu0 %v1437
  %1463 = vmatprep.subr.mxu0 0.0
  %1464 = vmatpush1.msra.mxu0 %v1438
  %1465 = vmatprep.subr.mxu0 0.0
  %1466 = vmatpush1.msra.mxu0 %v1439
  %1467 = vmatprep.subr.mxu0 0.0
  %1468 = vmatpush1.msra.mxu0 %v1440
  %1469 = vmatprep.subr.mxu0 0.0
  %1470 = vmatpush1.msra.mxu0 %v1441
  %1471 = vmatprep.subr.mxu0 0.0
  %1472 = vmatpush1.msra.mxu0 %v1442
  %1473 = vmatprep.subr.mxu0 0.0
  %1474 = vmatpush1.msra.mxu0 %v1443
  %1475 = vmatprep.subr.mxu0 0.0
  %1476 = vmatpush1.msra.mxu0 %v1444
  %1477 = vmatprep.subr.mxu0 0.0
  %1478 = vmatpush1.msra.mxu0 0.0
  %1479 = vmatprep.subr.mxu0 0.0
  %1480 = vmatpush1.msra.mxu0 0.0
  %1481 = vmatprep.subr.mxu0 0.0
  %1482 = vmatpush1.msra.mxu0 0.0
  %1483 = vmatprep.subr.mxu0 0.0
  %1484 = vmatpush1.msra.mxu0 0.0
  %1485 = vmatprep.subr.mxu0 0.0
  %1486 = vmatpush1.msra.mxu0 0.0
  %1487 = vmatprep.subr.mxu0 0.0
  %1488 = vmatpush1.msra.mxu0 0.0
  %1489 = vmatprep.subr.mxu0 0.0
  %1490 = vmatpush1.msra.mxu0 0.0
  %1491 = vmatprep.subr.mxu0 0.0
  %1492 = vmatpush1.msra.mxu0 0.0
  %1493 = vmatprep.subr.mxu0 0.0
  %1494 = vmatpush1.msra.mxu0 0.0
  %1495 = vmatprep.subr.mxu0 0.0
  %1496 = vmatpush1.msra.mxu0 0.0
  %1497 = vmatprep.subr.mxu0 0.0
  %1498 = vmatpush1.msra.mxu0 0.0
  %1499 = vmatprep.subr.mxu0 0.0
  %1500 = vmatpush1.msra.mxu0 0.0
  %1501 = vmatprep.subr.mxu0 0.0
  %1502 = vmatpush1.msra.mxu0 0.0
  %1503 = vmatprep.subr.mxu0 0.0
  %1504 = vmatpush1.msra.mxu0 0.0
  %1505 = vmatprep.subr.mxu0 0.0
  %1506 = vmatpush1.msra.mxu0 0.0
  %1507 = vmatprep.subr.mxu0 0.0
  %1508 = vmatpush1.msra.mxu0 0.0
  %1509 = vmatprep.mubr.f32.mxu0 0.0
  %1510 = vmatmul.mubr.f32.gmra.mrb[0].mxu0 %v1423
  %v1511 = vpop.f32.mrb[0].mxu0
  %v1512 = vadd.f32 0.0, %v1511
  %v1513 = vpop.f32.mrb[0].mxu0
  %1514 = vmatprep.mubr.f32.mxu0 0.0
  %1515 = vmatmul.mubr.f32.gmra.mrb[0].mxu0 %v1424
  %v1516 = vpop.f32.mrb[0].mxu0
  %v1517 = vadd.f32 0.0, %v1516
  %v1518 = vpop.f32.mrb[0].mxu0
  %1519 = vmatprep.mubr.f32.mxu0 0.0
  %1520 = vmatmul.mubr.f32.gmra.mrb[0].mxu0 %v1425
  %v1521 = vpop.f32.mrb[0].mxu0
  %v1522 = vadd.f32 0.0, %v1521
  %v1523 = vpop.f32.mrb[0].mxu0
  %1524 = vmatprep.mubr.f32.mxu0 0.0
  %1525 = vmatmul.mubr.f32.gmra.mrb[0].mxu0 %v1426
  %v1526 = vpop.f32.mrb[0].mxu0
  %v1527 = vadd.f32 0.0, %v1526
  %v1528 = vpop.f32.mrb[0].mxu0
  %1529 = vmatprep.mubr.f32.mxu0 0.0
  %1530 = vmatmul.mubr.f32.gmra.mrb[0].mxu0 %v1427
  %v1531 = vpop.f32.mrb[0].mxu0
  %v1532 = vadd.f32 0.0, %v1531
  %v1533 = vpop.f32.mrb[0].mxu0
  %1534 = vdwg.mxu0
  %v1535 = vadd.f32 %v1400, %v1512
  %v1536 = vadd.f32 %v1405, %v1517
  %v1537 = vadd.f32 %v1410, %v1522
  %v1538 = vadd.f32 %v1415, %v1527
  %v1539 = vadd.f32 %v1420, %v1532
  %v1541 = vlaneseq
  %v1542 = vshrl.u32 %v1541, 7
  %v1543 = vsub.s32 0, %v1542
  %v1544 = vrot.slane %v1196, %v1543
  %v1546 = vmul.f32 %v1535, %v1544
  %v1547 = vmul.f32 %v1536, %v1544
  %v1548 = vmul.f32 %v1537, %v1544
  %v1549 = vmul.f32 %v1538, %v1544
  %v1550 = vmul.f32 %v1539, %v1544
  %v1552 = vlaneseq
  %v1553 = vshrl.u32 %v1552, 7
  %v1554 = vsub.s32 0, %v1553
  %v1555 = vrot.slane %v1198, %v1554
  %v1557 = vadd.f32 %v1546, %v1555
  %v1558 = vadd.f32 %v1547, %v1555
  %v1559 = vadd.f32 %v1548, %v1555
  %v1560 = vadd.f32 %v1549, %v1555
  %v1561 = vadd.f32 %v1550, %v1555
  %v1562 = vmax.f32 %v1557, 0.0
  %v1563 = vmax.f32 %v1558, 0.0
  %v1564 = vmax.f32 %v1559, 0.0
  %v1565 = vmax.f32 %v1560, 0.0
  %v1566 = vmax.f32 %v1561, 0.0
  %1567 = vst [vmem:[#allocation3 + $0x1] sm:$0xff] %v1562
  %1568 = vst [vmem:[#allocation3 + $0x9] sm:$0xff] %v1563
  %1569 = vst [vmem:[#allocation3 + $0x11] sm:$0xfc] %v1564
  %1570 = vst [vmem:[#allocation3 + $0x19] sm:$0xff] %v1565
  %1571 = vst [vmem:[#allocation3 + $0x21] sm:$0x3] %v1566
  %s1572 = scalar_lea.vmem %s2, 4
  %v1573 = vld [vmem:[%s1572] sm:$0x1]
  %s1574 = scalar_lea.vmem %s3, 4
  %v1575 = vld [vmem:[%s1574] sm:$0x1]
  %v1576 = vld [vmem:[#allocation3] sm:$0xff]
  %v1577 = vld [vmem:[#allocation3 + $0x8] sm:$0xff]
  %v1578 = vld [vmem:[#allocation3 + $0x10] sm:$0xff]
  %v1579 = vld [vmem:[#allocation3 + $0x18] sm:$0xff]
  %v1580 = vld [vmem:[#allocation3 + $0x20] sm:$0x3]
  %s1581 = scalar_lea.vmem [#allocation4], 1152
  %v1582 = vld [vmem:[%s1581] sm:$0xff]
  %v1583 = vld [vmem:[%s1581 + $0x8] sm:$0xff]
  %v1584 = vld [vmem:[%s1581 + $0x10] sm:$0xff]
  %v1585 = vld [vmem:[%s1581 + $0x18] sm:$0xff]
  %v1586 = vld [vmem:[%s1581 + $0x20] sm:$0xff]
  %v1587 = vld [vmem:[%s1581 + $0x28] sm:$0xff]
  %v1588 = vld [vmem:[%s1581 + $0x30] sm:$0xff]
  %v1589 = vld [vmem:[%s1581 + $0x38] sm:$0xff]
  %v1590 = vld [vmem:[%s1581 + $0x40] sm:$0xff]
  %v1591 = vld [vmem:[%s1581 + $0x48] sm:$0xff]
  %v1592 = vld [vmem:[%s1581 + $0x50] sm:$0xff]
  %v1593 = vld [vmem:[%s1581 + $0x58] sm:$0xff]
  %v1594 = vld [vmem:[%s1581 + $0x60] sm:$0xff]
  %v1595 = vld [vmem:[%s1581 + $0x68] sm:$0xff]
  %v1596 = vld [vmem:[%s1581 + $0x70] sm:$0xff]
  %v1597 = vld [vmem:[%s1581 + $0x78] sm:$0xff]
  %v1598 = vld [vmem:[#allocation3 + $0x1] sm:$0xff]
  %v1599 = vld [vmem:[#allocation3 + $0x9] sm:$0xff]
  %v1600 = vld [vmem:[#allocation3 + $0x11] sm:$0xff]
  %v1601 = vld [vmem:[#allocation3 + $0x19] sm:$0xff]
  %v1602 = vld [vmem:[#allocation3 + $0x21] sm:$0x3]
  %s1603 = scalar_lea.vmem [#allocation4], 1280
  %v1604 = vld [vmem:[%s1603] sm:$0xff]
  %v1605 = vld [vmem:[%s1603 + $0x8] sm:$0xff]
  %v1606 = vld [vmem:[%s1603 + $0x10] sm:$0xff]
  %v1607 = vld [vmem:[%s1603 + $0x18] sm:$0xff]
  %v1608 = vld [vmem:[%s1603 + $0x20] sm:$0xff]
  %v1609 = vld [vmem:[%s1603 + $0x28] sm:$0xff]
  %v1610 = vld [vmem:[%s1603 + $0x30] sm:$0xff]
  %v1611 = vld [vmem:[%s1603 + $0x38] sm:$0xff]
  %v1612 = vld [vmem:[%s1603 + $0x40] sm:$0xff]
  %v1613 = vld [vmem:[%s1603 + $0x48] sm:$0xff]
  %v1614 = vld [vmem:[%s1603 + $0x50] sm:$0xff]
  %v1615 = vld [vmem:[%s1603 + $0x58] sm:$0xff]
  %v1616 = vld [vmem:[%s1603 + $0x60] sm:$0xff]
  %v1617 = vld [vmem:[%s1603 + $0x68] sm:$0xff]
  %v1618 = vld [vmem:[%s1603 + $0x70] sm:$0xff]
  %v1619 = vld [vmem:[%s1603 + $0x78] sm:$0xff]
  %1620 = vmatprep.subr.mxu0 0.0
  %1621 = vmatpush1.msra.mxu0 %v1604
  %1622 = vmatprep.subr.mxu0 0.0
  %1623 = vmatpush1.msra.mxu0 %v1605
  %1624 = vmatprep.subr.mxu0 0.0
  %1625 = vmatpush1.msra.mxu0 %v1606
  %1626 = vmatprep.subr.mxu0 0.0
  %1627 = vmatpush1.msra.mxu0 %v1607
  %1628 = vmatprep.subr.mxu0 0.0
  %1629 = vmatpush1.msra.mxu0 %v1608
  %1630 = vmatprep.subr.mxu0 0.0
  %1631 = vmatpush1.msra.mxu0 %v1609
  %1632 = vmatprep.subr.mxu0 0.0
  %1633 = vmatpush1.msra.mxu0 %v1610
  %1634 = vmatprep.subr.mxu0 0.0
  %1635 = vmatpush1.msra.mxu0 %v1611
  %1636 = vmatprep.subr.mxu0 0.0
  %1637 = vmatpush1.msra.mxu0 %v1612
  %1638 = vmatprep.subr.mxu0 0.0
  %1639 = vmatpush1.msra.mxu0 %v1613
  %1640 = vmatprep.subr.mxu0 0.0
  %1641 = vmatpush1.msra.mxu0 %v1614
  %1642 = vmatprep.subr.mxu0 0.0
  %1643 = vmatpush1.msra.mxu0 %v1615
  %1644 = vmatprep.subr.mxu0 0.0
  %1645 = vmatpush1.msra.mxu0 %v1616
  %1646 = vmatprep.subr.mxu0 0.0
  %1647 = vmatpush1.msra.mxu0 %v1617
  %1648 = vmatprep.subr.mxu0 0.0
  %1649 = vmatpush1.msra.mxu0 %v1618
  %1650 = vmatprep.subr.mxu0 0.0
  %1651 = vmatpush1.msra.mxu0 %v1619
  %1652 = vmatprep.subr.mxu0 0.0
  %1653 = vmatpush1.msra.mxu0 0.0
  %1654 = vmatprep.subr.mxu0 0.0
  %1655 = vmatpush1.msra.mxu0 0.0
  %1656 = vmatprep.subr.mxu0 0.0
  %1657 = vmatpush1.msra.mxu0 0.0
  %1658 = vmatprep.subr.mxu0 0.0
  %1659 = vmatpush1.msra.mxu0 0.0
  %1660 = vmatprep.subr.mxu0 0.0
  %1661 = vmatpush1.msra.mxu0 0.0
  %1662 = vmatprep.subr.mxu0 0.0
  %1663 = vmatpush1.msra.mxu0 0.0
  %1664 = vmatprep.subr.mxu0 0.0
  %1665 = vmatpush1.msra.mxu0 0.0
  %1666 = vmatprep.subr.mxu0 0.0
  %1667 = vmatpush1.msra.mxu0 0.0
  %1668 = vmatprep.subr.mxu0 0.0
  %1669 = vmatpush1.msra.mxu0 0.0
  %1670 = vmatprep.subr.mxu0 0.0
  %1671 = vmatpush1.msra.mxu0 0.0
  %1672 = vmatprep.subr.mxu0 0.0
  %1673 = vmatpush1.msra.mxu0 0.0
  %1674 = vmatprep.subr.mxu0 0.0
  %1675 = vmatpush1.msra.mxu0 0.0
  %1676 = vmatprep.subr.mxu0 0.0
  %1677 = vmatpush1.msra.mxu0 0.0
  %1678 = vmatprep.subr.mxu0 0.0
  %1679 = vmatpush1.msra.mxu0 0.0
  %1680 = vmatprep.subr.mxu0 0.0
  %1681 = vmatpush1.msra.mxu0 0.0
  %1682 = vmatprep.subr.mxu0 0.0
  %1683 = vmatpush1.msra.mxu0 0.0
  %1684 = vmatprep.mubr.f32.mxu0 0.0
  %1685 = vmatmul.mubr.f32.gmra.mrb[0].mxu0 %v1598
  %v1686 = vpop.f32.mrb[0].mxu0
  %v1687 = vadd.f32 0.0, %v1686
  %v1688 = vpop.f32.mrb[0].mxu0
  %1689 = vmatprep.mubr.f32.mxu0 0.0
  %1690 = vmatmul.mubr.f32.gmra.mrb[0].mxu0 %v1599
  %v1691 = vpop.f32.mrb[0].mxu0
  %v1692 = vadd.f32 0.0, %v1691
  %v1693 = vpop.f32.mrb[0].mxu0
  %1694 = vmatprep.mubr.f32.mxu0 0.0
  %1695 = vmatmul.mubr.f32.gmra.mrb[0].mxu0 %v1600
  %v1696 = vpop.f32.mrb[0].mxu0
  %v1697 = vadd.f32 0.0, %v1696
  %v1698 = vpop.f32.mrb[0].mxu0
  %1699 = vmatprep.mubr.f32.mxu0 0.0
  %1700 = vmatmul.mubr.f32.gmra.mrb[0].mxu0 %v1601
  %v1701 = vpop.f32.mrb[0].mxu0
  %v1702 = vadd.f32 0.0, %v1701
  %v1703 = vpop.f32.mrb[0].mxu0
  %1704 = vmatprep.mubr.f32.mxu0 0.0
  %1705 = vmatmul.mubr.f32.gmra.mrb[0].mxu0 %v1602
  %v1706 = vpop.f32.mrb[0].mxu0
  %v1707 = vadd.f32 0.0, %v1706
  %v1708 = vpop.f32.mrb[0].mxu0
  %1709 = vdwg.mxu0
  %1710 = vmatprep.subr.mxu0 0.0
  %1711 = vmatpush1.msra.mxu0 %v1582
  %1712 = vmatprep.subr.mxu0 0.0
  %1713 = vmatpush1.msra.mxu0 %v1583
  %1714 = vmatprep.subr.mxu0 0.0
  %1715 = vmatpush1.msra.mxu0 %v1584
  %1716 = vmatprep.subr.mxu0 0.0
  %1717 = vmatpush1.msra.mxu0 %v1585
  %1718 = vmatprep.subr.mxu0 0.0
  %1719 = vmatpush1.msra.mxu0 %v1586
  %1720 = vmatprep.subr.mxu0 0.0
  %1721 = vmatpush1.msra.mxu0 %v1587
  %1722 = vmatprep.subr.mxu0 0.0
  %1723 = vmatpush1.msra.mxu0 %v1588
  %1724 = vmatprep.subr.mxu0 0.0
  %1725 = vmatpush1.msra.mxu0 %v1589
  %1726 = vmatprep.subr.mxu0 0.0
  %1727 = vmatpush1.msra.mxu0 %v1590
  %1728 = vmatprep.subr.mxu0 0.0
  %1729 = vmatpush1.msra.mxu0 %v1591
  %1730 = vmatprep.subr.mxu0 0.0
  %1731 = vmatpush1.msra.mxu0 %v1592
  %1732 = vmatprep.subr.mxu0 0.0
  %1733 = vmatpush1.msra.mxu0 %v1593
  %1734 = vmatprep.subr.mxu0 0.0
  %1735 = vmatpush1.msra.mxu0 %v1594
  %1736 = vmatprep.subr.mxu0 0.0
  %1737 = vmatpush1.msra.mxu0 %v1595
  %1738 = vmatprep.subr.mxu0 0.0
  %1739 = vmatpush1.msra.mxu0 %v1596
  %1740 = vmatprep.subr.mxu0 0.0
  %1741 = vmatpush1.msra.mxu0 %v1597
  %1742 = vmatprep.subr.mxu0 0.0
  %1743 = vmatpush1.msra.mxu0 0.0
  %1744 = vmatprep.subr.mxu0 0.0
  %1745 = vmatpush1.msra.mxu0 0.0
  %1746 = vmatprep.subr.mxu0 0.0
  %1747 = vmatpush1.msra.mxu0 0.0
  %1748 = vmatprep.subr.mxu0 0.0
  %1749 = vmatpush1.msra.mxu0 0.0
  %1750 = vmatprep.subr.mxu0 0.0
  %1751 = vmatpush1.msra.mxu0 0.0
  %1752 = vmatprep.subr.mxu0 0.0
  %1753 = vmatpush1.msra.mxu0 0.0
  %1754 = vmatprep.subr.mxu0 0.0
  %1755 = vmatpush1.msra.mxu0 0.0
  %1756 = vmatprep.subr.mxu0 0.0
  %1757 = vmatpush1.msra.mxu0 0.0
  %1758 = vmatprep.subr.mxu0 0.0
  %1759 = vmatpush1.msra.mxu0 0.0
  %1760 = vmatprep.subr.mxu0 0.0
  %1761 = vmatpush1.msra.mxu0 0.0
  %1762 = vmatprep.subr.mxu0 0.0
  %1763 = vmatpush1.msra.mxu0 0.0
  %1764 = vmatprep.subr.mxu0 0.0
  %1765 = vmatpush1.msra.mxu0 0.0
  %1766 = vmatprep.subr.mxu0 0.0
  %1767 = vmatpush1.msra.mxu0 0.0
  %1768 = vmatprep.subr.mxu0 0.0
  %1769 = vmatpush1.msra.mxu0 0.0
  %1770 = vmatprep.subr.mxu0 0.0
  %1771 = vmatpush1.msra.mxu0 0.0
  %1772 = vmatprep.subr.mxu0 0.0
  %1773 = vmatpush1.msra.mxu0 0.0
  %1774 = vmatprep.mubr.f32.mxu0 0.0
  %1775 = vmatmul.mubr.f32.gmra.mrb[0].mxu0 %v1576
  %v1776 = vpop.f32.mrb[0].mxu0
  %v1777 = vadd.f32 %v1687, %v1776
  %v1778 = vpop.f32.mrb[0].mxu0
  %1779 = vmatprep.mubr.f32.mxu0 0.0
  %1780 = vmatmul.mubr.f32.gmra.mrb[0].mxu0 %v1577
  %v1781 = vpop.f32.mrb[0].mxu0
  %v1782 = vadd.f32 %v1692, %v1781
  %v1783 = vpop.f32.mrb[0].mxu0
  %1784 = vmatprep.mubr.f32.mxu0 0.0
  %1785 = vmatmul.mubr.f32.gmra.mrb[0].mxu0 %v1578
  %v1786 = vpop.f32.mrb[0].mxu0
  %v1787 = vadd.f32 %v1697, %v1786
  %v1788 = vpop.f32.mrb[0].mxu0
  %1789 = vmatprep.mubr.f32.mxu0 0.0
  %1790 = vmatmul.mubr.f32.gmra.mrb[0].mxu0 %v1579
  %v1791 = vpop.f32.mrb[0].mxu0
  %v1792 = vadd.f32 %v1702, %v1791
  %v1793 = vpop.f32.mrb[0].mxu0
  %1794 = vmatprep.mubr.f32.mxu0 0.0
  %1795 = vmatmul.mubr.f32.gmra.mrb[0].mxu0 %v1580
  %v1796 = vpop.f32.mrb[0].mxu0
  %v1797 = vadd.f32 %v1707, %v1796
  %v1798 = vpop.f32.mrb[0].mxu0
  %1799 = vdwg.mxu0
  %v1800 = vld [vmem:[#allocation3 + $0x2] sm:$0xff]
  %v1801 = vld [vmem:[#allocation3 + $0xa] sm:$0xff]
  %v1802 = vld [vmem:[#allocation3 + $0x12] sm:$0xff]
  %v1803 = vld [vmem:[#allocation3 + $0x1a] sm:$0xff]
  %v1804 = vld [vmem:[#allocation3 + $0x22] sm:$0x3]
  %s1805 = scalar_lea.vmem [#allocation4], 1408
  %v1806 = vld [vmem:[%s1805] sm:$0xff]
  %v1807 = vld [vmem:[%s1805 + $0x8] sm:$0xff]
  %v1808 = vld [vmem:[%s1805 + $0x10] sm:$0xff]
  %v1809 = vld [vmem:[%s1805 + $0x18] sm:$0xff]
  %v1810 = vld [vmem:[%s1805 + $0x20] sm:$0xff]
  %v1811 = vld [vmem:[%s1805 + $0x28] sm:$0xff]
  %v1812 = vld [vmem:[%s1805 + $0x30] sm:$0xff]
  %v1813 = vld [vmem:[%s1805 + $0x38] sm:$0xff]
  %v1814 = vld [vmem:[%s1805 + $0x40] sm:$0xff]
  %v1815 = vld [vmem:[%s1805 + $0x48] sm:$0xff]
  %v1816 = vld [vmem:[%s1805 + $0x50] sm:$0xff]
  %v1817 = vld [vmem:[%s1805 + $0x58] sm:$0xff]
  %v1818 = vld [vmem:[%s1805 + $0x60] sm:$0xff]
  %v1819 = vld [vmem:[%s1805 + $0x68] sm:$0xff]
  %v1820 = vld [vmem:[%s1805 + $0x70] sm:$0xff]
  %v1821 = vld [vmem:[%s1805 + $0x78] sm:$0xff]
  %1822 = vmatprep.subr.mxu0 0.0
  %1823 = vmatpush1.msra.mxu0 %v1806
  %1824 = vmatprep.subr.mxu0 0.0
  %1825 = vmatpush1.msra.mxu0 %v1807
  %1826 = vmatprep.subr.mxu0 0.0
  %1827 = vmatpush1.msra.mxu0 %v1808
  %1828 = vmatprep.subr.mxu0 0.0
  %1829 = vmatpush1.msra.mxu0 %v1809
  %1830 = vmatprep.subr.mxu0 0.0
  %1831 = vmatpush1.msra.mxu0 %v1810
  %1832 = vmatprep.subr.mxu0 0.0
  %1833 = vmatpush1.msra.mxu0 %v1811
  %1834 = vmatprep.subr.mxu0 0.0
  %1835 = vmatpush1.msra.mxu0 %v1812
  %1836 = vmatprep.subr.mxu0 0.0
  %1837 = vmatpush1.msra.mxu0 %v1813
  %1838 = vmatprep.subr.mxu0 0.0
  %1839 = vmatpush1.msra.mxu0 %v1814
  %1840 = vmatprep.subr.mxu0 0.0
  %1841 = vmatpush1.msra.mxu0 %v1815
  %1842 = vmatprep.subr.mxu0 0.0
  %1843 = vmatpush1.msra.mxu0 %v1816
  %1844 = vmatprep.subr.mxu0 0.0
  %1845 = vmatpush1.msra.mxu0 %v1817
  %1846 = vmatprep.subr.mxu0 0.0
  %1847 = vmatpush1.msra.mxu0 %v1818
  %1848 = vmatprep.subr.mxu0 0.0
  %1849 = vmatpush1.msra.mxu0 %v1819
  %1850 = vmatprep.subr.mxu0 0.0
  %1851 = vmatpush1.msra.mxu0 %v1820
  %1852 = vmatprep.subr.mxu0 0.0
  %1853 = vmatpush1.msra.mxu0 %v1821
  %1854 = vmatprep.subr.mxu0 0.0
  %1855 = vmatpush1.msra.mxu0 0.0
  %1856 = vmatprep.subr.mxu0 0.0
  %1857 = vmatpush1.msra.mxu0 0.0
  %1858 = vmatprep.subr.mxu0 0.0
  %1859 = vmatpush1.msra.mxu0 0.0
  %1860 = vmatprep.subr.mxu0 0.0
  %1861 = vmatpush1.msra.mxu0 0.0
  %1862 = vmatprep.subr.mxu0 0.0
  %1863 = vmatpush1.msra.mxu0 0.0
  %1864 = vmatprep.subr.mxu0 0.0
  %1865 = vmatpush1.msra.mxu0 0.0
  %1866 = vmatprep.subr.mxu0 0.0
  %1867 = vmatpush1.msra.mxu0 0.0
  %1868 = vmatprep.subr.mxu0 0.0
  %1869 = vmatpush1.msra.mxu0 0.0
  %1870 = vmatprep.subr.mxu0 0.0
  %1871 = vmatpush1.msra.mxu0 0.0
  %1872 = vmatprep.subr.mxu0 0.0
  %1873 = vmatpush1.msra.mxu0 0.0
  %1874 = vmatprep.subr.mxu0 0.0
  %1875 = vmatpush1.msra.mxu0 0.0
  %1876 = vmatprep.subr.mxu0 0.0
  %1877 = vmatpush1.msra.mxu0 0.0
  %1878 = vmatprep.subr.mxu0 0.0
  %1879 = vmatpush1.msra.mxu0 0.0
  %1880 = vmatprep.subr.mxu0 0.0
  %1881 = vmatpush1.msra.mxu0 0.0
  %1882 = vmatprep.subr.mxu0 0.0
  %1883 = vmatpush1.msra.mxu0 0.0
  %1884 = vmatprep.subr.mxu0 0.0
  %1885 = vmatpush1.msra.mxu0 0.0
  %1886 = vmatprep.mubr.f32.mxu0 0.0
  %1887 = vmatmul.mubr.f32.gmra.mrb[0].mxu0 %v1800
  %v1888 = vpop.f32.mrb[0].mxu0
  %v1889 = vadd.f32 0.0, %v1888
  %v1890 = vpop.f32.mrb[0].mxu0
  %1891 = vmatprep.mubr.f32.mxu0 0.0
  %1892 = vmatmul.mubr.f32.gmra.mrb[0].mxu0 %v1801
  %v1893 = vpop.f32.mrb[0].mxu0
  %v1894 = vadd.f32 0.0, %v1893
  %v1895 = vpop.f32.mrb[0].mxu0
  %1896 = vmatprep.mubr.f32.mxu0 0.0
  %1897 = vmatmul.mubr.f32.gmra.mrb[0].mxu0 %v1802
  %v1898 = vpop.f32.mrb[0].mxu0
  %v1899 = vadd.f32 0.0, %v1898
  %v1900 = vpop.f32.mrb[0].mxu0
  %1901 = vmatprep.mubr.f32.mxu0 0.0
  %1902 = vmatmul.mubr.f32.gmra.mrb[0].mxu0 %v1803
  %v1903 = vpop.f32.mrb[0].mxu0
  %v1904 = vadd.f32 0.0, %v1903
  %v1905 = vpop.f32.mrb[0].mxu0
  %1906 = vmatprep.mubr.f32.mxu0 0.0
  %1907 = vmatmul.mubr.f32.gmra.mrb[0].mxu0 %v1804
  %v1908 = vpop.f32.mrb[0].mxu0
  %v1909 = vadd.f32 0.0, %v1908
  %v1910 = vpop.f32.mrb[0].mxu0
  %1911 = vdwg.mxu0
  %v1912 = vadd.f32 %v1777, %v1889
  %v1913 = vadd.f32 %v1782, %v1894
  %v1914 = vadd.f32 %v1787, %v1899
  %v1915 = vadd.f32 %v1792, %v1904
  %v1916 = vadd.f32 %v1797, %v1909
  %v1918 = vlaneseq
  %v1919 = vshrl.u32 %v1918, 7
  %v1920 = vsub.s32 0, %v1919
  %v1921 = vrot.slane %v1573, %v1920
  %v1923 = vmul.f32 %v1912, %v1921
  %v1924 = vmul.f32 %v1913, %v1921
  %v1925 = vmul.f32 %v1914, %v1921
  %v1926 = vmul.f32 %v1915, %v1921
  %v1927 = vmul.f32 %v1916, %v1921
  %v1929 = vlaneseq
  %v1930 = vshrl.u32 %v1929, 7
  %v1931 = vsub.s32 0, %v1930
  %v1932 = vrot.slane %v1575, %v1931
  %v1934 = vadd.f32 %v1923, %v1932
  %v1935 = vadd.f32 %v1924, %v1932
  %v1936 = vadd.f32 %v1925, %v1932
  %v1937 = vadd.f32 %v1926, %v1932
  %v1938 = vadd.f32 %v1927, %v1932
  %v1939 = vld [vmem:[#allocation2 + $0x1] sm:$0xff]
  %v1940 = vld [vmem:[#allocation2 + $0x9] sm:$0xff]
  %v1941 = vld [vmem:[#allocation2 + $0x11] sm:$0xff]
  %v1942 = vld [vmem:[#allocation2 + $0x19] sm:$0xff]
  %v1943 = vld [vmem:[#allocation2 + $0x21] sm:$0x3]
  %v1944 = vadd.f32 %v1934, %v1939
  %v1945 = vadd.f32 %v1935, %v1940
  %v1946 = vadd.f32 %v1936, %v1941
  %v1947 = vadd.f32 %v1937, %v1942
  %v1948 = vadd.f32 %v1938, %v1943
  %v1949 = vmax.f32 %v1944, 0.0
  %v1950 = vmax.f32 %v1945, 0.0
  %v1951 = vmax.f32 %v1946, 0.0
  %v1952 = vmax.f32 %v1947, 0.0
  %v1953 = vmax.f32 %v1948, 0.0
  %1954 = vst [vmem:[%s5] sm:$0xff] %v1949
  %1955 = vst [vmem:[%s5 + $0x8] sm:$0xff] %v1950
  %1956 = vst [vmem:[%s5 + $0xe] sm:$0xfc] %v1951
  %1957 = vst [vmem:[%s5 + $0x16] sm:$0xff] %v1952
  %1958 = vst [vmem:[%s5 + $0x1e] sm:$0x3] %v1953
  // Predicated region
  $region22: #{resnet_client_forward.1} parent=0 // pred_check
    _
  $region23: #{resnet_client_forward.1} parent=0 // pred_check_branch
    %1960 = sbr.rel (0) target = $region25
  $region24: #{resnet_client_forward.1} parent=0 // pred_region
    _
  $region25: #{resnet_client_forward.1} parent=0 // pred_fallthru
    _
  // Predicated region
  $region26: #{resnet_client_forward.1} parent=0 // pred_check
    _
  $region27: #{resnet_client_forward.1} parent=0 // pred_check_branch
    %1962 = sbr.rel (0) target = $region29
  $region28: #{resnet_client_forward.1} parent=0 // pred_region
    _
  $region29: #{resnet_client_forward.1} parent=0 // pred_fallthru
    _
  %1963 = vsyncmov [#allocation5]
  %s1964 = vpop.sfrf %1963
  %p1965 = scmp.eq.s32.totalorder %s1964, 0
  %p1966 = pneg %p1965
  %1968 = shalt.err (%p1966)

</llo_original>
